<compile_context>
chip_gen: v7x
topology: tpu7x:2x2x1
jax: 0.10.0
libtpu: 0.0.40
codegen_flags: <defaults>
</compile_context>

<pallas_src>
import jax
import jax.numpy as jnp
from jax.experimental import pallas as pl
from jax.experimental.pallas import tpu as pltpu


def _round_up(x, m):
    return (x + m - 1) // m * m


def _discriminator_kernel(x_ref, ybias_ref, w1_ref, w2_ref, b2_ref,
                          w3_ref, b3_ref, o_ref):
    """One batch tile of: Linear -> LReLU(0.2) -> Linear -> LReLU(0.2) -> Linear -> Sigmoid."""
    # ---- layer 1: f32 input cast to bf16 on-chip, MXU matmul, f32 accumulate
    x = x_ref[...].astype(jnp.bfloat16)
    h1 = jnp.dot(x, w1_ref[...], preferred_element_type=jnp.float32)
    # label path (embedding @ w1_lab + b1) arrives as a pre-gathered bias row
    h1 = h1 + ybias_ref[...]
    h1 = jnp.where(h1 > 0, h1, 0.2 * h1)            # LeakyReLU(0.2), f32 (safe on v5e)

    # ---- layer 2
    h2 = jnp.dot(h1.astype(jnp.bfloat16), w2_ref[...],
                 preferred_element_type=jnp.float32)
    h2 = h2 + b2_ref[...]
    h2 = jnp.where(h2 > 0, h2, 0.2 * h2)

    # ---- layer 3 (512 -> 1): VPU multiply + lane reduction instead of N=1 MXU matmul
    h3 = jnp.sum(h2 * w3_ref[...], axis=-1, keepdims=True) + b3_ref[...]
    o_ref[...] = jax.nn.sigmoid(h3)


def prepare_params(params, *, lane=128):
    """One-time packing of f32 training params into kernel-ready arrays.

    Called once (at init / after each param update), NOT per forward call, so
    the f32->bf16 casts and the label-path projection never hit the hot path.
    """
    d_img, h1_dim = params["w1_img"].shape
    d_pad = _round_up(d_img, lane)
    w1 = params["w1_img"].astype(jnp.float32)
    if d_pad != d_img:
        # zero rows: padded x columns (also zero) contribute nothing
        w1 = jnp.pad(w1, ((0, d_pad - d_img), (0, 0)))
    # label path folded into a per-class bias table: emb @ w1_lab + b1
    ybias_table = (params["label_emb"].astype(jnp.float32)
                   @ params["w1_lab"].astype(jnp.float32)
                   + params["b1"].astype(jnp.float32))
    return {
        "w1_img": w1.astype(jnp.bfloat16),                       # (d_pad, 512)
        "ybias_table": ybias_table.astype(jnp.bfloat16),         # (NC, 512)
        "w2": params["w2"].astype(jnp.bfloat16),                 # (512, 512)
        "b2": params["b2"].astype(jnp.float32),                  # (1, 512)
        "w3_row": params["w3"].reshape(1, -1).astype(jnp.float32),  # (1, 512)
        "b3": params["b3"].astype(jnp.float32),                  # (1, 1)
    }


def discriminator_forward(inputs, y, kparams, *, max_batch_tile=512):
    """inputs: (B, C, H, W) float32, y: (B,) int32 labels, kparams: prepare_params() output."""
    B = inputs.shape[0]
    x_flat = inputs.reshape(B, -1)                    # stays f32; cast happens in-kernel
    d_img = x_flat.shape[1]

    d_pad, h1_dim = kparams["w1_img"].shape
    h2_dim = kparams["w2"].shape[1]
    if d_pad != d_img:
        x_flat = jnp.pad(x_flat, ((0, 0), (0, d_pad - d_img)))

    # per-row label bias (tiny gather from the precomputed table)
    ybias = jnp.take(kparams["ybias_table"], y, axis=0)          # (B, 512) bf16

    # Batch tiling: >=2 grid steps whenever B > 8 (v7x megacore engages),
    # up to 512 rows per step on single-TC v5e/v6e.
    tb = min(max_batch_tile, _round_up((B + 1) // 2, 8))
    b_pad = _round_up(B, tb)
    if b_pad != B:
        x_flat = jnp.pad(x_flat, ((0, b_pad - B), (0, 0)))
        ybias = jnp.pad(ybias, ((0, b_pad - B), (0, 0)))
    grid = (b_pad // tb,)

    # Resident (fetched-once) operands: constant index_map + single buffer.
    resident = lambda shape: pl.BlockSpec(shape, lambda i: (0,) * len(shape),
                                          pipeline_mode=pl.Buffered(1))

    out = pl.pallas_call(
        _discriminator_kernel,
        out_shape=jax.ShapeDtypeStruct((b_pad, 1), jnp.float32),
        grid_spec=pltpu.PrefetchScalarGridSpec(
            num_scalar_prefetch=0,
            grid=grid,
            in_specs=[
                # batch-tiled activation streams (double-buffered by default)
                pl.BlockSpec((tb, d_pad), lambda i: (i, 0)),
                pl.BlockSpec((tb, h1_dim), lambda i: (i, 0)),
                # resident weights / biases
                resident((d_pad, h1_dim)),
                resident((h1_dim, h2_dim)),
                resident((1, h2_dim)),
                resident((1, h2_dim)),
                resident((1, 1)),
            ],
            out_specs=pl.BlockSpec((tb, 1), lambda i: (i, 0)),
        ),
        compiler_params=pltpu.CompilerParams(
            # independent batch tiles -> megacore sharding on v7x
            dimension_semantics=("parallel",),
        ),
    )(x_flat, ybias, kparams["w1_img"], kparams["w2"], kparams["b2"],
      kparams["w3_row"], kparams["b3"])

    out = out[:B]
    # Match torch's .squeeze(): (B, 1) -> (B,)  (and scalar when B == 1).
    return jnp.squeeze(out)


def init_params(key, in_shape, num_classes=10):
    """Deterministic synthetic f32 init; shapes match the nn.Module (w1 split row-wise)."""
    d_flat = 1
    for s in in_shape:
        d_flat *= s
    d_in = d_flat + num_classes

    k = jax.random.split(key, 8)
    scale = lambda fan_in: 1.0 / jnp.sqrt(jnp.float32(fan_in))
    params = {
        "label_emb": jax.random.normal(k[0], (num_classes, num_classes), jnp.float32),
        # first Linear (d_in, 512) split row-wise: image rows / label rows
        "w1_img": jax.random.normal(k[1], (d_flat, 512), jnp.float32) * scale(d_in),
        "w1_lab": jax.random.normal(k[2], (num_classes, 512), jnp.float32) * scale(d_in),
        "b1": jax.random.normal(k[3], (1, 512), jnp.float32) * 0.01,
        "w2": jax.random.normal(k[4], (512, 512), jnp.float32) * scale(512),
        "b2": jax.random.normal(k[5], (1, 512), jnp.float32) * 0.01,
        "w3": jax.random.normal(k[6], (512, 1), jnp.float32) * scale(512),
        "b3": jax.random.normal(k[7], (1, 1), jnp.float32) * 0.01,
    }
    return params


def _reference_forward(inputs, y, params):
    """Pure-JAX f32 reference (mathematically identical to the torch module)."""
    y_emb = jnp.take(params["label_emb"], y, axis=0)
    x = inputs.reshape(inputs.shape[0], -1)
    h = x @ params["w1_img"] + y_emb @ params["w1_lab"] + params["b1"]
    h = jnp.where(h > 0, h, 0.2 * h)
    h = h @ params["w2"] + params["b2"]
    h = jnp.where(h > 0, h, 0.2 * h)
    h = h @ params["w3"] + params["b3"]
    return jnp.squeeze(jax.nn.sigmoid(h))


if __name__ == "__main__":
    key = jax.random.PRNGKey(0)
    k_params, k_x, k_y = jax.random.split(key, 3)

    in_shape = (4, 16, 16)           # (C, H, W) -> flattened dim 1024
    num_classes = 10
    B = 2

    params = init_params(k_params, in_shape, num_classes)
    kparams = prepare_params(params)          # one-time packing (bf16 weights etc.)

    x = jax.random.normal(k_x, (B,) + in_shape, jnp.float32)   # NCHW
    y = jax.random.randint(k_y, (B,), 0, num_classes, jnp.int32)

    out = discriminator_forward(x, y, kparams)
    out = jax.block_until_ready(out)

    ref = jax.block_until_ready(_reference_forward(x, y, params))
    assert out.shape == (B,), out.shape
    # bf16 matmul inputs / label-bias table with f32 accumulation -> small deviation vs f32 ref.
    assert jnp.allclose(out, ref, atol=2e-2, rtol=0.0), (out, ref)

    print("KERNEL_OK")
</pallas_src>

<mosaic_0001>
module attributes {stable_mosaic.version = 11 : i64} {
  func.func @_discriminator_kernel(%arg0: i32, %arg1: memref<8x1024xf32, #tpu.memory_space<vmem>>, %arg2: memref<8x512xbf16, #tpu.memory_space<vmem>>, %arg3: memref<1024x512xbf16, #tpu.memory_space<vmem>>, %arg4: memref<512x512xbf16, #tpu.memory_space<vmem>>, %arg5: memref<1x512xf32, #tpu.memory_space<vmem>>, %arg6: memref<1x512xf32, #tpu.memory_space<vmem>>, %arg7: memref<1x1xf32, #tpu.memory_space<vmem>>, %arg8: memref<8x1xf32, #tpu.memory_space<vmem>>) attributes {dimension_semantics = [#tpu.dimension_semantics<parallel>], iteration_bounds = array<i64: 1>, scalar_prefetch = 0 : i64, scratch_operands = 0 : i64, tpu.core_type = #tpu.core_type<tc>, window_params = [{transform_indices = @transform_0, window_bounds = array<i64: 8, 1024>}, {transform_indices = @transform_1, window_bounds = array<i64: 8, 512>}, {pipeline_mode = #tpu.pipeline_mode<synchronous>, transform_indices = @transform_2, window_bounds = array<i64: 1024, 512>}, {pipeline_mode = #tpu.pipeline_mode<synchronous>, transform_indices = @transform_3, window_bounds = array<i64: 512, 512>}, {pipeline_mode = #tpu.pipeline_mode<synchronous>, transform_indices = @transform_4, window_bounds = array<i64: 1, 512>}, {pipeline_mode = #tpu.pipeline_mode<synchronous>, transform_indices = @transform_5, window_bounds = array<i64: 1, 512>}, {pipeline_mode = #tpu.pipeline_mode<synchronous>, transform_indices = @transform_6, window_bounds = array<i64: 1, 1>}, {transform_indices = @transform_7, window_bounds = array<i64: 8, 1>}]} {
    %c0 = arith.constant 0 : index
    %c0_0 = arith.constant 0 : index
    %0 = vector.load %arg1[%c0, %c0_0] : memref<8x1024xf32, #tpu.memory_space<vmem>>, vector<8x1024xf32>
    %1 = arith.truncf %0 : vector<8x1024xf32> to vector<8x1024xbf16>
    %c0_1 = arith.constant 0 : index
    %c0_2 = arith.constant 0 : index
    %2 = vector.load %arg3[%c0_1, %c0_2] : memref<1024x512xbf16, #tpu.memory_space<vmem>>, vector<1024x512xbf16>
    %cst = arith.constant dense<0.000000e+00> : vector<8x512xf32>
    %3 = tpu.matmul %1, %2, %cst {dimension_numbers = #tpu.dot_dimension_numbers<[1], [0], [0], [1], [0, 0, 1, 1], [], []>} : vector<8x1024xbf16>, vector<1024x512xbf16>, vector<8x512xf32> -> vector<8x512xf32>
    %c0_3 = arith.constant 0 : index
    %c0_4 = arith.constant 0 : index
    %4 = vector.load %arg2[%c0_3, %c0_4] : memref<8x512xbf16, #tpu.memory_space<vmem>>, vector<8x512xbf16>
    %5 = arith.extf %4 : vector<8x512xbf16> to vector<8x512xf32>
    %6 = arith.addf %3, %5 : vector<8x512xf32>
    %cst_5 = arith.constant 0.000000e+00 : f32
    %7 = vector.broadcast %cst_5 : f32 to vector<8x512xf32>
    %8 = arith.cmpf ogt, %6, %7 : vector<8x512xf32>
    %cst_6 = arith.constant 2.000000e-01 : f32
    %9 = vector.broadcast %cst_6 : f32 to vector<8x512xf32>
    %10 = arith.mulf %9, %6 : vector<8x512xf32>
    %11 = arith.select %8, %6, %10 : vector<8x512xi1>, vector<8x512xf32>
    %12 = arith.truncf %11 : vector<8x512xf32> to vector<8x512xbf16>
    %c0_7 = arith.constant 0 : index
    %c0_8 = arith.constant 0 : index
    %13 = vector.load %arg4[%c0_7, %c0_8] : memref<512x512xbf16, #tpu.memory_space<vmem>>, vector<512x512xbf16>
    %cst_9 = arith.constant dense<0.000000e+00> : vector<8x512xf32>
    %14 = tpu.matmul %12, %13, %cst_9 {dimension_numbers = #tpu.dot_dimension_numbers<[1], [0], [0], [1], [0, 0, 1, 1], [], []>} : vector<8x512xbf16>, vector<512x512xbf16>, vector<8x512xf32> -> vector<8x512xf32>
    %c0_10 = arith.constant 0 : index
    %c0_11 = arith.constant 0 : index
    %15 = vector.load %arg5[%c0_10, %c0_11] : memref<1x512xf32, #tpu.memory_space<vmem>>, vector<1x512xf32>
    %16 = vector.broadcast %15 : vector<1x512xf32> to vector<8x512xf32>
    %17 = arith.addf %14, %16 : vector<8x512xf32>
    %cst_12 = arith.constant 0.000000e+00 : f32
    %18 = vector.broadcast %cst_12 : f32 to vector<8x512xf32>
    %19 = arith.cmpf ogt, %17, %18 : vector<8x512xf32>
    %cst_13 = arith.constant 2.000000e-01 : f32
    %20 = vector.broadcast %cst_13 : f32 to vector<8x512xf32>
    %21 = arith.mulf %20, %17 : vector<8x512xf32>
    %22 = arith.select %19, %17, %21 : vector<8x512xi1>, vector<8x512xf32>
    %c0_14 = arith.constant 0 : index
    %c0_15 = arith.constant 0 : index
    %23 = vector.load %arg6[%c0_14, %c0_15] : memref<1x512xf32, #tpu.memory_space<vmem>>, vector<1x512xf32>
    %24 = vector.broadcast %23 : vector<1x512xf32> to vector<8x512xf32>
    %25 = arith.mulf %22, %24 : vector<8x512xf32>
    %cst_16 = arith.constant dense<0.000000e+00> : vector<8xf32>
    %26 = vector.multi_reduction <add>, %25, %cst_16 [1] : vector<8x512xf32> to vector<8xf32>
    %27 = vector.shape_cast %26 : vector<8xf32> to vector<8x1xf32>
    %c0_17 = arith.constant 0 : index
    %c0_18 = arith.constant 0 : index
    %28 = vector.load %arg7[%c0_17, %c0_18] : memref<1x1xf32, #tpu.memory_space<vmem>>, vector<1x1xf32>
    %29 = vector.broadcast %28 : vector<1x1xf32> to vector<8x1xf32>
    %30 = arith.addf %27, %29 : vector<8x1xf32>
    %31 = arith.negf %30 : vector<8x1xf32>
    %32 = math.exp %31 : vector<8x1xf32>
    %cst_19 = arith.constant 1.000000e+00 : f32
    %33 = vector.broadcast %cst_19 : f32 to vector<8x1xf32>
    %34 = arith.addf %33, %32 : vector<8x1xf32>
    %35 = arith.divf %33, %34 : vector<8x1xf32>
    %c0_20 = arith.constant 0 : index
    %c0_21 = arith.constant 0 : index
    %36 = vector.load %arg8[%c0_20, %c0_21] : memref<8x1xf32, #tpu.memory_space<vmem>>, vector<8x1xf32>
    tpu.vector_store %arg8[%c0_20, %c0_21], %35 {strides = array<i32>} : memref<8x1xf32, #tpu.memory_space<vmem>>, vector<8x1xf32>,
    return
  }
  func.func @transform_0(%arg0: i32) -> (i32, i32) {
    %c0_i32 = arith.constant 0 : i32
    %c0_i32_0 = arith.constant 0 : i32
    return %arg0, %c0_i32 : i32, i32
  }
  func.func @transform_1(%arg0: i32) -> (i32, i32) {
    %c0_i32 = arith.constant 0 : i32
    %c0_i32_0 = arith.constant 0 : i32
    return %arg0, %c0_i32 : i32, i32
  }
  func.func @transform_2(%arg0: i32) -> (i32, i32) {
    %c0_i32 = arith.constant 0 : i32
    %c0_i32_0 = arith.constant 0 : i32
    %c0_i32_1 = arith.constant 0 : i32
    return %c0_i32, %c0_i32_0 : i32, i32
  }
  func.func @transform_3(%arg0: i32) -> (i32, i32) {
    %c0_i32 = arith.constant 0 : i32
    %c0_i32_0 = arith.constant 0 : i32
    %c0_i32_1 = arith.constant 0 : i32
    return %c0_i32, %c0_i32_0 : i32, i32
  }
  func.func @transform_4(%arg0: i32) -> (i32, i32) {
    %c0_i32 = arith.constant 0 : i32
    %c0_i32_0 = arith.constant 0 : i32
    %c0_i32_1 = arith.constant 0 : i32
    return %c0_i32, %c0_i32_0 : i32, i32
  }
  func.func @transform_5(%arg0: i32) -> (i32, i32) {
    %c0_i32 = arith.constant 0 : i32
    %c0_i32_0 = arith.constant 0 : i32
    %c0_i32_1 = arith.constant 0 : i32
    return %c0_i32, %c0_i32_0 : i32, i32
  }
  func.func @transform_6(%arg0: i32) -> (i32, i32) {
    %c0_i32 = arith.constant 0 : i32
    %c0_i32_0 = arith.constant 0 : i32
    %c0_i32_1 = arith.constant 0 : i32
    return %c0_i32, %c0_i32_0 : i32, i32
  }
  func.func @transform_7(%arg0: i32) -> (i32, i32) {
    %c0_i32 = arith.constant 0 : i32
    %c0_i32_0 = arith.constant 0 : i32
    return %arg0, %c0_i32 : i32, i32
  }
}

</mosaic_0001>

<llo_original>
// kernel: tpu_custom_call.1
$region0: #{tpu_custom_call.1}
  #allocation0 [shape = 'u32[]', space=smem, size = 0x4, offset = 0x4, fixed_abs, tag = 'smem constant byte address 0x4 - core index']
  #allocation1 [shape = 'u32[144,128]{1,0:T(1,128)}', space=vmem, size = 0x12000, scoped, tag = 'internal scratch']
  #allocation2 [shape = 'f32[1,1]{1,0:T(1,128)S(1)}', space=vmem, size = 0x200, scoped, tag = 'scoped memory for tpu_custom_call.1']
  %s0 = inlined_call_operand.hbm [shape: f32[8,1024], index: 0, kind: input, shape index: {}]
  %s1 = inlined_call_operand.hbm [shape: bf16[8,512], index: 1, kind: input, shape index: {}]
  %s2 = inlined_call_operand.hbm [shape: bf16[1024,512], index: 2, kind: input, shape index: {}]
  %s3 = inlined_call_operand.hbm [shape: bf16[512,512], index: 3, kind: input, shape index: {}]
  %s4 = inlined_call_operand.vmem [shape: f32[1,512], index: 4, kind: input, shape index: {}]
  %s5 = inlined_call_operand.vmem [shape: f32[1,512], index: 5, kind: input, shape index: {}]
  %s6 = inlined_call_operand.<no memory space> [shape: f32[1,1], index: 6, kind: input, shape index: {}]
  %s7 = inlined_call_operand.vmem [shape: f32[8,1], index: 7, kind: output, shape index: {}]
  %s8 = sld [smem:[#allocation0]]
  $region54: #{tpu_custom_call.1} parent=0
    _
  %s10 = ssub.s32 1, %s8
  %s11 = scalar_select 0, %s10, %s8
  %v12 = vstv %s6
  %13 = vst [vmem:[#allocation2] sm:$0x1] %v12
  $region1: #{tpu_custom_call.1} parent=0
    #allocation3 [shape = 'u8[32768]{0}', space=vmem, size = 0x8000, scoped, tag = 'input window, operand 0, single buffered']
    #allocation4 [shape = 's32[1]{0}', space=sflag, size = 0x4, scoped, tag = 'scoped memory for tpu_custom_call.1']
    #allocation5 [shape = 'u8[8192]{0}', space=vmem, size = 0x2000, scoped, tag = 'input window, operand 1, single buffered']
    #allocation6 [shape = 's32[1]{0}', space=sflag, size = 0x4, scoped, tag = 'scoped memory for tpu_custom_call.1']
    #allocation7 [shape = 'u8[1048576]{0}', space=vmem, size = 0x100000, scoped, tag = 'input window, operand 2, single buffered']
    #allocation8 [shape = 'u8[524288]{0}', space=vmem, size = 0x80000, scoped, tag = 'input window, operand 3, single buffered']
    #allocation9 [shape = 's32[1]{0}', space=sflag, size = 0x4, scoped, tag = 'scoped memory for tpu_custom_call.1']
    %14 = vsyncpa [#allocation4], 0
    %15 = vsyncpa [#allocation6], 0
    %16 = vsyncpa [#allocation9], 0
    // Predicated region
    $region2: #{tpu_custom_call.1} parent=1 // pred_check
      _
    $region3: #{tpu_custom_call.1} parent=1 // pred_check_branch
      %18 = sbr.rel (0) target = $region5
    $region4: #{tpu_custom_call.1} parent=1 // pred_region
      %s20 = ssub.s32 1024, 1024
      %21 = vsyncadd [#allocation4], %s20
      %s23 = sshll.u32 [#allocation3], 4
      %s24 = int_to_ptr.vmem [resolvable:$true] %s23
      %26 = dma.hbm_to_vmem [thread:$0]  %s0, 1024, %s24, [#allocation4]
    $region5: #{tpu_custom_call.1} parent=1 // pred_fallthru
      _
    // Predicated region
    $region6: #{tpu_custom_call.1} parent=1 // pred_check
      _
    $region7: #{tpu_custom_call.1} parent=1 // pred_check_branch
      %28 = sbr.rel (0) target = $region9
    $region8: #{tpu_custom_call.1} parent=1 // pred_region
      %s30 = ssub.s32 256, 256
      %31 = vsyncadd [#allocation6], %s30
      %s33 = sshll.u32 [#allocation5], 4
      %s34 = int_to_ptr.vmem [resolvable:$true] %s33
      %36 = dma.hbm_to_vmem [thread:$0]  %s1, 256, %s34, [#allocation6]
    $region9: #{tpu_custom_call.1} parent=1 // pred_fallthru
      _
    // Predicated region
    $region10: #{tpu_custom_call.1} parent=1 // pred_check
      _
    $region11: #{tpu_custom_call.1} parent=1 // pred_check_branch
      %38 = sbr.rel (0) target = $region13
    $region12: #{tpu_custom_call.1} parent=1 // pred_region
      %s40 = ssub.s32 32768, 32768
      %41 = vsyncadd [#allocation6], %s40
      %s42 = sshll.u32 [#allocation7], 4
      %s43 = int_to_ptr.vmem [resolvable:$true] %s42
      %48 = dma.hbm_to_vmem [thread:$0]  %s2, 32768, %s43, [#allocation6], 256, 256, 16
    $region13: #{tpu_custom_call.1} parent=1 // pred_fallthru
      _
    // Predicated region
    $region14: #{tpu_custom_call.1} parent=1 // pred_check
      _
    $region15: #{tpu_custom_call.1} parent=1 // pred_check_branch
      %50 = sbr.rel (0) target = $region17
    $region16: #{tpu_custom_call.1} parent=1 // pred_region
      %s52 = ssub.s32 16384, 16384
      %53 = vsyncadd [#allocation9], %s52
      %s54 = sshll.u32 [#allocation8], 4
      %s55 = int_to_ptr.vmem [resolvable:$true] %s54
      %60 = dma.hbm_to_vmem [thread:$0]  %s3, 16384, %s55, [#allocation9], 256, 256, 16
    $region17: #{tpu_custom_call.1} parent=1 // pred_fallthru
      _
    // Predicated region
    $region18: #{tpu_custom_call.1} parent=1 // pred_check
      _
    $region19: #{tpu_custom_call.1} parent=1 // pred_check_branch
      %62 = sbr.rel (0) target = $region21
    $region20: #{tpu_custom_call.1} parent=1 // pred_region
      _
    $region21: #{tpu_custom_call.1} parent=1 // pred_fallthru
      _
    // Predicated region
    $region22: #{tpu_custom_call.1} parent=1 // pred_check
      _
    $region23: #{tpu_custom_call.1} parent=1 // pred_check_branch
      %64 = sbr.rel (0) target = $region25
    $region24: #{tpu_custom_call.1} parent=1 // pred_region
      _
    $region25: #{tpu_custom_call.1} parent=1 // pred_fallthru
      _
    // Predicated region
    $region26: #{tpu_custom_call.1} parent=1 // pred_check
      _
    $region27: #{tpu_custom_call.1} parent=1 // pred_check_branch
      %66 = sbr.rel (0) target = $region29
    $region28: #{tpu_custom_call.1} parent=1 // pred_region
      _
    $region29: #{tpu_custom_call.1} parent=1 // pred_fallthru
      _
    // Predicated region
    $region30: #{tpu_custom_call.1} parent=1 // pred_check
      _
    $region31: #{tpu_custom_call.1} parent=1 // pred_check_branch
      %68 = sbr.rel (0) target = $region33
    $region32: #{tpu_custom_call.1} parent=1 // pred_region
      %69 = dma.done [#allocation4], 1024
    $region33: #{tpu_custom_call.1} parent=1 // pred_fallthru
      _
    // Predicated region
    $region34: #{tpu_custom_call.1} parent=1 // pred_check
      _
    $region35: #{tpu_custom_call.1} parent=1 // pred_check_branch
      %71 = sbr.rel (0) target = $region37
    $region36: #{tpu_custom_call.1} parent=1 // pred_region
      %72 = dma.done [#allocation6], 256
    $region37: #{tpu_custom_call.1} parent=1 // pred_fallthru
      _
    // Predicated region
    $region38: #{tpu_custom_call.1} parent=1 // pred_check
      _
    $region39: #{tpu_custom_call.1} parent=1 // pred_check_branch
      %74 = sbr.rel (0) target = $region41
    $region40: #{tpu_custom_call.1} parent=1 // pred_region
      %75 = dma.done [#allocation6], 32768
    $region41: #{tpu_custom_call.1} parent=1 // pred_fallthru
      _
    // Predicated region
    $region42: #{tpu_custom_call.1} parent=1 // pred_check
      _
    $region43: #{tpu_custom_call.1} parent=1 // pred_check_branch
      %77 = sbr.rel (0) target = $region45
    $region44: #{tpu_custom_call.1} parent=1 // pred_region
      %78 = dma.done [#allocation9], 16384
    $region45: #{tpu_custom_call.1} parent=1 // pred_fallthru
      _
    %v79 = vld [vmem:[#allocation3] sm:$0xff]
    %v80 = vld [vmem:[#allocation3 + $0x8] sm:$0xff]
    %v81 = vld [vmem:[#allocation3 + $0x10] sm:$0xff]
    %v82 = vld [vmem:[#allocation3 + $0x18] sm:$0xff]
    %v83 = vld [vmem:[#allocation3 + $0x20] sm:$0xff]
    %v84 = vld [vmem:[#allocation3 + $0x28] sm:$0xff]
    %v85 = vld [vmem:[#allocation3 + $0x30] sm:$0xff]
    %v86 = vld [vmem:[#allocation3 + $0x38] sm:$0xff]
    %v87 = vpack.c.bf16 %v79, %v79
    %v88 = vpack.c.bf16 %v80, %v80
    %v89 = vpack.c.bf16 %v81, %v81
    %v90 = vpack.c.bf16 %v82, %v82
    %v91 = vpack.c.bf16 %v83, %v83
    %v92 = vpack.c.bf16 %v84, %v84
    %v93 = vpack.c.bf16 %v85, %v85
    %v94 = vpack.c.bf16 %v86, %v86
    %v95 = vld [vmem:[#allocation7] sm:$0xff]
    %v96 = vld [vmem:[#allocation7 + $0x8] sm:$0xff]
    %v97 = vld [vmem:[#allocation7 + $0x10] sm:$0xff]
    %v98 = vld [vmem:[#allocation7 + $0x18] sm:$0xff]
    %v99 = vld [vmem:[#allocation7 + $0x20] sm:$0xff]
    %v100 = vld [vmem:[#allocation7 + $0x28] sm:$0xff]
    %v101 = vld [vmem:[#allocation7 + $0x30] sm:$0xff]
    %v102 = vld [vmem:[#allocation7 + $0x38] sm:$0xff]
    %v103 = vld [vmem:[#allocation7 + $0x40] sm:$0xff]
    %v104 = vld [vmem:[#allocation7 + $0x48] sm:$0xff]
    %v105 = vld [vmem:[#allocation7 + $0x50] sm:$0xff]
    %v106 = vld [vmem:[#allocation7 + $0x58] sm:$0xff]
    %v107 = vld [vmem:[#allocation7 + $0x60] sm:$0xff]
    %v108 = vld [vmem:[#allocation7 + $0x68] sm:$0xff]
    %v109 = vld [vmem:[#allocation7 + $0x70] sm:$0xff]
    %v110 = vld [vmem:[#allocation7 + $0x78] sm:$0xff]
    %v111 = vld [vmem:[#allocation7 + $0x80] sm:$0xff]
    %v112 = vld [vmem:[#allocation7 + $0x88] sm:$0xff]
    %v113 = vld [vmem:[#allocation7 + $0x90] sm:$0xff]
    %v114 = vld [vmem:[#allocation7 + $0x98] sm:$0xff]
    %v115 = vld [vmem:[#allocation7 + $0xa0] sm:$0xff]
    %v116 = vld [vmem:[#allocation7 + $0xa8] sm:$0xff]
    %v117 = vld [vmem:[#allocation7 + $0xb0] sm:$0xff]
    %v118 = vld [vmem:[#allocation7 + $0xb8] sm:$0xff]
    %v119 = vld [vmem:[#allocation7 + $0xc0] sm:$0xff]
    %v120 = vld [vmem:[#allocation7 + $0xc8] sm:$0xff]
    %v121 = vld [vmem:[#allocation7 + $0xd0] sm:$0xff]
    %v122 = vld [vmem:[#allocation7 + $0xd8] sm:$0xff]
    %v123 = vld [vmem:[#allocation7 + $0xe0] sm:$0xff]
    %v124 = vld [vmem:[#allocation7 + $0xe8] sm:$0xff]
    %v125 = vld [vmem:[#allocation7 + $0xf0] sm:$0xff]
    %v126 = vld [vmem:[#allocation7 + $0xf8] sm:$0xff]
    %v127 = vld [vmem:[#allocation7 + $0x100] sm:$0xff]
    %v128 = vld [vmem:[#allocation7 + $0x108] sm:$0xff]
    %v129 = vld [vmem:[#allocation7 + $0x110] sm:$0xff]
    %v130 = vld [vmem:[#allocation7 + $0x118] sm:$0xff]
    %v131 = vld [vmem:[#allocation7 + $0x120] sm:$0xff]
    %v132 = vld [vmem:[#allocation7 + $0x128] sm:$0xff]
    %v133 = vld [vmem:[#allocation7 + $0x130] sm:$0xff]
    %v134 = vld [vmem:[#allocation7 + $0x138] sm:$0xff]
    %v135 = vld [vmem:[#allocation7 + $0x140] sm:$0xff]
    %v136 = vld [vmem:[#allocation7 + $0x148] sm:$0xff]
    %v137 = vld [vmem:[#allocation7 + $0x150] sm:$0xff]
    %v138 = vld [vmem:[#allocation7 + $0x158] sm:$0xff]
    %v139 = vld [vmem:[#allocation7 + $0x160] sm:$0xff]
    %v140 = vld [vmem:[#allocation7 + $0x168] sm:$0xff]
    %v141 = vld [vmem:[#allocation7 + $0x170] sm:$0xff]
    %v142 = vld [vmem:[#allocation7 + $0x178] sm:$0xff]
    %v143 = vld [vmem:[#allocation7 + $0x180] sm:$0xff]
    %v144 = vld [vmem:[#allocation7 + $0x188] sm:$0xff]
    %v145 = vld [vmem:[#allocation7 + $0x190] sm:$0xff]
    %v146 = vld [vmem:[#allocation7 + $0x198] sm:$0xff]
    %v147 = vld [vmem:[#allocation7 + $0x1a0] sm:$0xff]
    %v148 = vld [vmem:[#allocation7 + $0x1a8] sm:$0xff]
    %v149 = vld [vmem:[#allocation7 + $0x1b0] sm:$0xff]
    %v150 = vld [vmem:[#allocation7 + $0x1b8] sm:$0xff]
    %v151 = vld [vmem:[#allocation7 + $0x1c0] sm:$0xff]
    %v152 = vld [vmem:[#allocation7 + $0x1c8] sm:$0xff]
    %v153 = vld [vmem:[#allocation7 + $0x1d0] sm:$0xff]
    %v154 = vld [vmem:[#allocation7 + $0x1d8] sm:$0xff]
    %v155 = vld [vmem:[#allocation7 + $0x1e0] sm:$0xff]
    %v156 = vld [vmem:[#allocation7 + $0x1e8] sm:$0xff]
    %v157 = vld [vmem:[#allocation7 + $0x1f0] sm:$0xff]
    %v158 = vld [vmem:[#allocation7 + $0x1f8] sm:$0xff]
    %v159 = vld [vmem:[#allocation7 + $0x200] sm:$0xff]
    %v160 = vld [vmem:[#allocation7 + $0x208] sm:$0xff]
    %v161 = vld [vmem:[#allocation7 + $0x210] sm:$0xff]
    %v162 = vld [vmem:[#allocation7 + $0x218] sm:$0xff]
    %v163 = vld [vmem:[#allocation7 + $0x220] sm:$0xff]
    %v164 = vld [vmem:[#allocation7 + $0x228] sm:$0xff]
    %v165 = vld [vmem:[#allocation7 + $0x230] sm:$0xff]
    %v166 = vld [vmem:[#allocation7 + $0x238] sm:$0xff]
    %v167 = vld [vmem:[#allocation7 + $0x240] sm:$0xff]
    %v168 = vld [vmem:[#allocation7 + $0x248] sm:$0xff]
    %v169 = vld [vmem:[#allocation7 + $0x250] sm:$0xff]
    %v170 = vld [vmem:[#allocation7 + $0x258] sm:$0xff]
    %v171 = vld [vmem:[#allocation7 + $0x260] sm:$0xff]
    %v172 = vld [vmem:[#allocation7 + $0x268] sm:$0xff]
    %v173 = vld [vmem:[#allocation7 + $0x270] sm:$0xff]
    %v174 = vld [vmem:[#allocation7 + $0x278] sm:$0xff]
    %v175 = vld [vmem:[#allocation7 + $0x280] sm:$0xff]
    %v176 = vld [vmem:[#allocation7 + $0x288] sm:$0xff]
    %v177 = vld [vmem:[#allocation7 + $0x290] sm:$0xff]
    %v178 = vld [vmem:[#allocation7 + $0x298] sm:$0xff]
    %v179 = vld [vmem:[#allocation7 + $0x2a0] sm:$0xff]
    %v180 = vld [vmem:[#allocation7 + $0x2a8] sm:$0xff]
    %v181 = vld [vmem:[#allocation7 + $0x2b0] sm:$0xff]
    %v182 = vld [vmem:[#allocation7 + $0x2b8] sm:$0xff]
    %v183 = vld [vmem:[#allocation7 + $0x2c0] sm:$0xff]
    %v184 = vld [vmem:[#allocation7 + $0x2c8] sm:$0xff]
    %v185 = vld [vmem:[#allocation7 + $0x2d0] sm:$0xff]
    %v186 = vld [vmem:[#allocation7 + $0x2d8] sm:$0xff]
    %v187 = vld [vmem:[#allocation7 + $0x2e0] sm:$0xff]
    %v188 = vld [vmem:[#allocation7 + $0x2e8] sm:$0xff]
    %v189 = vld [vmem:[#allocation7 + $0x2f0] sm:$0xff]
    %v190 = vld [vmem:[#allocation7 + $0x2f8] sm:$0xff]
    %v191 = vld [vmem:[#allocation7 + $0x300] sm:$0xff]
    %v192 = vld [vmem:[#allocation7 + $0x308] sm:$0xff]
    %v193 = vld [vmem:[#allocation7 + $0x310] sm:$0xff]
    %v194 = vld [vmem:[#allocation7 + $0x318] sm:$0xff]
    %v195 = vld [vmem:[#allocation7 + $0x320] sm:$0xff]
    %v196 = vld [vmem:[#allocation7 + $0x328] sm:$0xff]
    %v197 = vld [vmem:[#allocation7 + $0x330] sm:$0xff]
    %v198 = vld [vmem:[#allocation7 + $0x338] sm:$0xff]
    %v199 = vld [vmem:[#allocation7 + $0x340] sm:$0xff]
    %v200 = vld [vmem:[#allocation7 + $0x348] sm:$0xff]
    %v201 = vld [vmem:[#allocation7 + $0x350] sm:$0xff]
    %v202 = vld [vmem:[#allocation7 + $0x358] sm:$0xff]
    %v203 = vld [vmem:[#allocation7 + $0x360] sm:$0xff]
    %v204 = vld [vmem:[#allocation7 + $0x368] sm:$0xff]
    %v205 = vld [vmem:[#allocation7 + $0x370] sm:$0xff]
    %v206 = vld [vmem:[#allocation7 + $0x378] sm:$0xff]
    %v207 = vld [vmem:[#allocation7 + $0x380] sm:$0xff]
    %v208 = vld [vmem:[#allocation7 + $0x388] sm:$0xff]
    %v209 = vld [vmem:[#allocation7 + $0x390] sm:$0xff]
    %v210 = vld [vmem:[#allocation7 + $0x398] sm:$0xff]
    %v211 = vld [vmem:[#allocation7 + $0x3a0] sm:$0xff]
    %v212 = vld [vmem:[#allocation7 + $0x3a8] sm:$0xff]
    %v213 = vld [vmem:[#allocation7 + $0x3b0] sm:$0xff]
    %v214 = vld [vmem:[#allocation7 + $0x3b8] sm:$0xff]
    %v215 = vld [vmem:[#allocation7 + $0x3c0] sm:$0xff]
    %v216 = vld [vmem:[#allocation7 + $0x3c8] sm:$0xff]
    %v217 = vld [vmem:[#allocation7 + $0x3d0] sm:$0xff]
    %v218 = vld [vmem:[#allocation7 + $0x3d8] sm:$0xff]
    %v219 = vld [vmem:[#allocation7 + $0x3e0] sm:$0xff]
    %v220 = vld [vmem:[#allocation7 + $0x3e8] sm:$0xff]
    %v221 = vld [vmem:[#allocation7 + $0x3f0] sm:$0xff]
    %v222 = vld [vmem:[#allocation7 + $0x3f8] sm:$0xff]
    %v223 = vld [vmem:[#allocation7 + $0x400] sm:$0xff]
    %v224 = vld [vmem:[#allocation7 + $0x408] sm:$0xff]
    %v225 = vld [vmem:[#allocation7 + $0x410] sm:$0xff]
    %v226 = vld [vmem:[#allocation7 + $0x418] sm:$0xff]
    %v227 = vld [vmem:[#allocation7 + $0x420] sm:$0xff]
    %v228 = vld [vmem:[#allocation7 + $0x428] sm:$0xff]
    %v229 = vld [vmem:[#allocation7 + $0x430] sm:$0xff]
    %v230 = vld [vmem:[#allocation7 + $0x438] sm:$0xff]
    %v231 = vld [vmem:[#allocation7 + $0x440] sm:$0xff]
    %v232 = vld [vmem:[#allocation7 + $0x448] sm:$0xff]
    %v233 = vld [vmem:[#allocation7 + $0x450] sm:$0xff]
    %v234 = vld [vmem:[#allocation7 + $0x458] sm:$0xff]
    %v235 = vld [vmem:[#allocation7 + $0x460] sm:$0xff]
    %v236 = vld [vmem:[#allocation7 + $0x468] sm:$0xff]
    %v237 = vld [vmem:[#allocation7 + $0x470] sm:$0xff]
    %v238 = vld [vmem:[#allocation7 + $0x478] sm:$0xff]
    %v239 = vld [vmem:[#allocation7 + $0x480] sm:$0xff]
    %v240 = vld [vmem:[#allocation7 + $0x488] sm:$0xff]
    %v241 = vld [vmem:[#allocation7 + $0x490] sm:$0xff]
    %v242 = vld [vmem:[#allocation7 + $0x498] sm:$0xff]
    %v243 = vld [vmem:[#allocation7 + $0x4a0] sm:$0xff]
    %v244 = vld [vmem:[#allocation7 + $0x4a8] sm:$0xff]
    %v245 = vld [vmem:[#allocation7 + $0x4b0] sm:$0xff]
    %v246 = vld [vmem:[#allocation7 + $0x4b8] sm:$0xff]
    %v247 = vld [vmem:[#allocation7 + $0x4c0] sm:$0xff]
    %v248 = vld [vmem:[#allocation7 + $0x4c8] sm:$0xff]
    %v249 = vld [vmem:[#allocation7 + $0x4d0] sm:$0xff]
    %v250 = vld [vmem:[#allocation7 + $0x4d8] sm:$0xff]
    %v251 = vld [vmem:[#allocation7 + $0x4e0] sm:$0xff]
    %v252 = vld [vmem:[#allocation7 + $0x4e8] sm:$0xff]
    %v253 = vld [vmem:[#allocation7 + $0x4f0] sm:$0xff]
    %v254 = vld [vmem:[#allocation7 + $0x4f8] sm:$0xff]
    %v255 = vld [vmem:[#allocation7 + $0x500] sm:$0xff]
    %v256 = vld [vmem:[#allocation7 + $0x508] sm:$0xff]
    %v257 = vld [vmem:[#allocation7 + $0x510] sm:$0xff]
    %v258 = vld [vmem:[#allocation7 + $0x518] sm:$0xff]
    %v259 = vld [vmem:[#allocation7 + $0x520] sm:$0xff]
    %v260 = vld [vmem:[#allocation7 + $0x528] sm:$0xff]
    %v261 = vld [vmem:[#allocation7 + $0x530] sm:$0xff]
    %v262 = vld [vmem:[#allocation7 + $0x538] sm:$0xff]
    %v263 = vld [vmem:[#allocation7 + $0x540] sm:$0xff]
    %v264 = vld [vmem:[#allocation7 + $0x548] sm:$0xff]
    %v265 = vld [vmem:[#allocation7 + $0x550] sm:$0xff]
    %v266 = vld [vmem:[#allocation7 + $0x558] sm:$0xff]
    %v267 = vld [vmem:[#allocation7 + $0x560] sm:$0xff]
    %v268 = vld [vmem:[#allocation7 + $0x568] sm:$0xff]
    %v269 = vld [vmem:[#allocation7 + $0x570] sm:$0xff]
    %v270 = vld [vmem:[#allocation7 + $0x578] sm:$0xff]
    %v271 = vld [vmem:[#allocation7 + $0x580] sm:$0xff]
    %v272 = vld [vmem:[#allocation7 + $0x588] sm:$0xff]
    %v273 = vld [vmem:[#allocation7 + $0x590] sm:$0xff]
    %v274 = vld [vmem:[#allocation7 + $0x598] sm:$0xff]
    %v275 = vld [vmem:[#allocation7 + $0x5a0] sm:$0xff]
    %v276 = vld [vmem:[#allocation7 + $0x5a8] sm:$0xff]
    %v277 = vld [vmem:[#allocation7 + $0x5b0] sm:$0xff]
    %v278 = vld [vmem:[#allocation7 + $0x5b8] sm:$0xff]
    %v279 = vld [vmem:[#allocation7 + $0x5c0] sm:$0xff]
    %v280 = vld [vmem:[#allocation7 + $0x5c8] sm:$0xff]
    %v281 = vld [vmem:[#allocation7 + $0x5d0] sm:$0xff]
    %v282 = vld [vmem:[#allocation7 + $0x5d8] sm:$0xff]
    %v283 = vld [vmem:[#allocation7 + $0x5e0] sm:$0xff]
    %v284 = vld [vmem:[#allocation7 + $0x5e8] sm:$0xff]
    %v285 = vld [vmem:[#allocation7 + $0x5f0] sm:$0xff]
    %v286 = vld [vmem:[#allocation7 + $0x5f8] sm:$0xff]
    %v287 = vld [vmem:[#allocation7 + $0x600] sm:$0xff]
    %v288 = vld [vmem:[#allocation7 + $0x608] sm:$0xff]
    %v289 = vld [vmem:[#allocation7 + $0x610] sm:$0xff]
    %v290 = vld [vmem:[#allocation7 + $0x618] sm:$0xff]
    %v291 = vld [vmem:[#allocation7 + $0x620] sm:$0xff]
    %v292 = vld [vmem:[#allocation7 + $0x628] sm:$0xff]
    %v293 = vld [vmem:[#allocation7 + $0x630] sm:$0xff]
    %v294 = vld [vmem:[#allocation7 + $0x638] sm:$0xff]
    %v295 = vld [vmem:[#allocation7 + $0x640] sm:$0xff]
    %v296 = vld [vmem:[#allocation7 + $0x648] sm:$0xff]
    %v297 = vld [vmem:[#allocation7 + $0x650] sm:$0xff]
    %v298 = vld [vmem:[#allocation7 + $0x658] sm:$0xff]
    %v299 = vld [vmem:[#allocation7 + $0x660] sm:$0xff]
    %v300 = vld [vmem:[#allocation7 + $0x668] sm:$0xff]
    %v301 = vld [vmem:[#allocation7 + $0x670] sm:$0xff]
    %v302 = vld [vmem:[#allocation7 + $0x678] sm:$0xff]
    %v303 = vld [vmem:[#allocation7 + $0x680] sm:$0xff]
    %v304 = vld [vmem:[#allocation7 + $0x688] sm:$0xff]
    %v305 = vld [vmem:[#allocation7 + $0x690] sm:$0xff]
    %v306 = vld [vmem:[#allocation7 + $0x698] sm:$0xff]
    %v307 = vld [vmem:[#allocation7 + $0x6a0] sm:$0xff]
    %v308 = vld [vmem:[#allocation7 + $0x6a8] sm:$0xff]
    %v309 = vld [vmem:[#allocation7 + $0x6b0] sm:$0xff]
    %v310 = vld [vmem:[#allocation7 + $0x6b8] sm:$0xff]
    %v311 = vld [vmem:[#allocation7 + $0x6c0] sm:$0xff]
    %v312 = vld [vmem:[#allocation7 + $0x6c8] sm:$0xff]
    %v313 = vld [vmem:[#allocation7 + $0x6d0] sm:$0xff]
    %v314 = vld [vmem:[#allocation7 + $0x6d8] sm:$0xff]
    %v315 = vld [vmem:[#allocation7 + $0x6e0] sm:$0xff]
    %v316 = vld [vmem:[#allocation7 + $0x6e8] sm:$0xff]
    %v317 = vld [vmem:[#allocation7 + $0x6f0] sm:$0xff]
    %v318 = vld [vmem:[#allocation7 + $0x6f8] sm:$0xff]
    %v319 = vld [vmem:[#allocation7 + $0x700] sm:$0xff]
    %v320 = vld [vmem:[#allocation7 + $0x708] sm:$0xff]
    %v321 = vld [vmem:[#allocation7 + $0x710] sm:$0xff]
    %v322 = vld [vmem:[#allocation7 + $0x718] sm:$0xff]
    %v323 = vld [vmem:[#allocation7 + $0x720] sm:$0xff]
    %v324 = vld [vmem:[#allocation7 + $0x728] sm:$0xff]
    %v325 = vld [vmem:[#allocation7 + $0x730] sm:$0xff]
    %v326 = vld [vmem:[#allocation7 + $0x738] sm:$0xff]
    %v327 = vld [vmem:[#allocation7 + $0x740] sm:$0xff]
    %v328 = vld [vmem:[#allocation7 + $0x748] sm:$0xff]
    %v329 = vld [vmem:[#allocation7 + $0x750] sm:$0xff]
    %v330 = vld [vmem:[#allocation7 + $0x758] sm:$0xff]
    %v331 = vld [vmem:[#allocation7 + $0x760] sm:$0xff]
    %v332 = vld [vmem:[#allocation7 + $0x768] sm:$0xff]
    %v333 = vld [vmem:[#allocation7 + $0x770] sm:$0xff]
    %v334 = vld [vmem:[#allocation7 + $0x778] sm:$0xff]
    %v335 = vld [vmem:[#allocation7 + $0x780] sm:$0xff]
    %v336 = vld [vmem:[#allocation7 + $0x788] sm:$0xff]
    %v337 = vld [vmem:[#allocation7 + $0x790] sm:$0xff]
    %v338 = vld [vmem:[#allocation7 + $0x798] sm:$0xff]
    %v339 = vld [vmem:[#allocation7 + $0x7a0] sm:$0xff]
    %v340 = vld [vmem:[#allocation7 + $0x7a8] sm:$0xff]
    %v341 = vld [vmem:[#allocation7 + $0x7b0] sm:$0xff]
    %v342 = vld [vmem:[#allocation7 + $0x7b8] sm:$0xff]
    %v343 = vld [vmem:[#allocation7 + $0x7c0] sm:$0xff]
    %v344 = vld [vmem:[#allocation7 + $0x7c8] sm:$0xff]
    %v345 = vld [vmem:[#allocation7 + $0x7d0] sm:$0xff]
    %v346 = vld [vmem:[#allocation7 + $0x7d8] sm:$0xff]
    %v347 = vld [vmem:[#allocation7 + $0x7e0] sm:$0xff]
    %v348 = vld [vmem:[#allocation7 + $0x7e8] sm:$0xff]
    %v349 = vld [vmem:[#allocation7 + $0x7f0] sm:$0xff]
    %v350 = vld [vmem:[#allocation7 + $0x7f8] sm:$0xff]
    %v351 = vld [vmem:[#allocation5] sm:$0xff]
    %v352 = vld [vmem:[#allocation5 + $0x8] sm:$0xff]
    %v353 = vunpack.c.l.bf16 %v351
    %v354 = vunpack.c.h.bf16 %v351
    %v355 = vunpack.c.l.bf16 %v352
    %v356 = vunpack.c.h.bf16 %v352
    %v613 = vunpack.c.l.b16 %v95
    %v614 = vunpack.c.h.b16 %v95
    %v615 = vunpack.c.l.b16 %v96
    %v616 = vunpack.c.h.b16 %v96
    %v617 = vunpack.c.l.b16 %v97
    %v618 = vunpack.c.h.b16 %v97
    %v619 = vunpack.c.l.b16 %v98
    %v620 = vunpack.c.h.b16 %v98
    %v621 = vunpack.c.l.b16 %v99
    %v622 = vunpack.c.h.b16 %v99
    %v623 = vunpack.c.l.b16 %v100
    %v624 = vunpack.c.h.b16 %v100
    %v625 = vunpack.c.l.b16 %v101
    %v626 = vunpack.c.h.b16 %v101
    %v627 = vunpack.c.l.b16 %v102
    %v628 = vunpack.c.h.b16 %v102
    %v629 = vunpack.c.l.b16 %v103
    %v630 = vunpack.c.h.b16 %v103
    %v631 = vunpack.c.l.b16 %v104
    %v632 = vunpack.c.h.b16 %v104
    %v633 = vunpack.c.l.b16 %v105
    %v634 = vunpack.c.h.b16 %v105
    %v635 = vunpack.c.l.b16 %v106
    %v636 = vunpack.c.h.b16 %v106
    %v637 = vunpack.c.l.b16 %v107
    %v638 = vunpack.c.h.b16 %v107
    %v639 = vunpack.c.l.b16 %v108
    %v640 = vunpack.c.h.b16 %v108
    %v641 = vunpack.c.l.b16 %v109
    %v642 = vunpack.c.h.b16 %v109
    %v643 = vunpack.c.l.b16 %v110
    %v644 = vunpack.c.h.b16 %v110
    %v645 = vunpack.c.l.b16 %v111
    %v646 = vunpack.c.h.b16 %v111
    %v647 = vunpack.c.l.b16 %v112
    %v648 = vunpack.c.h.b16 %v112
    %v649 = vunpack.c.l.b16 %v113
    %v650 = vunpack.c.h.b16 %v113
    %v651 = vunpack.c.l.b16 %v114
    %v652 = vunpack.c.h.b16 %v114
    %v653 = vunpack.c.l.b16 %v115
    %v654 = vunpack.c.h.b16 %v115
    %v655 = vunpack.c.l.b16 %v116
    %v656 = vunpack.c.h.b16 %v116
    %v657 = vunpack.c.l.b16 %v117
    %v658 = vunpack.c.h.b16 %v117
    %v659 = vunpack.c.l.b16 %v118
    %v660 = vunpack.c.h.b16 %v118
    %v661 = vunpack.c.l.b16 %v119
    %v662 = vunpack.c.h.b16 %v119
    %v663 = vunpack.c.l.b16 %v120
    %v664 = vunpack.c.h.b16 %v120
    %v665 = vunpack.c.l.b16 %v121
    %v666 = vunpack.c.h.b16 %v121
    %v667 = vunpack.c.l.b16 %v122
    %v668 = vunpack.c.h.b16 %v122
    %v669 = vunpack.c.l.b16 %v123
    %v670 = vunpack.c.h.b16 %v123
    %v671 = vunpack.c.l.b16 %v124
    %v672 = vunpack.c.h.b16 %v124
    %v673 = vunpack.c.l.b16 %v125
    %v674 = vunpack.c.h.b16 %v125
    %v675 = vunpack.c.l.b16 %v126
    %v676 = vunpack.c.h.b16 %v126
    %v677 = vunpack.c.l.b16 %v127
    %v678 = vunpack.c.h.b16 %v127
    %v679 = vunpack.c.l.b16 %v128
    %v680 = vunpack.c.h.b16 %v128
    %v681 = vunpack.c.l.b16 %v129
    %v682 = vunpack.c.h.b16 %v129
    %v683 = vunpack.c.l.b16 %v130
    %v684 = vunpack.c.h.b16 %v130
    %v685 = vunpack.c.l.b16 %v131
    %v686 = vunpack.c.h.b16 %v131
    %v687 = vunpack.c.l.b16 %v132
    %v688 = vunpack.c.h.b16 %v132
    %v689 = vunpack.c.l.b16 %v133
    %v690 = vunpack.c.h.b16 %v133
    %v691 = vunpack.c.l.b16 %v134
    %v692 = vunpack.c.h.b16 %v134
    %v693 = vunpack.c.l.b16 %v135
    %v694 = vunpack.c.h.b16 %v135
    %v695 = vunpack.c.l.b16 %v136
    %v696 = vunpack.c.h.b16 %v136
    %v697 = vunpack.c.l.b16 %v137
    %v698 = vunpack.c.h.b16 %v137
    %v699 = vunpack.c.l.b16 %v138
    %v700 = vunpack.c.h.b16 %v138
    %v701 = vunpack.c.l.b16 %v139
    %v702 = vunpack.c.h.b16 %v139
    %v703 = vunpack.c.l.b16 %v140
    %v704 = vunpack.c.h.b16 %v140
    %v705 = vunpack.c.l.b16 %v141
    %v706 = vunpack.c.h.b16 %v141
    %v707 = vunpack.c.l.b16 %v142
    %v708 = vunpack.c.h.b16 %v142
    %v709 = vunpack.c.l.b16 %v143
    %v710 = vunpack.c.h.b16 %v143
    %v711 = vunpack.c.l.b16 %v144
    %v712 = vunpack.c.h.b16 %v144
    %v713 = vunpack.c.l.b16 %v145
    %v714 = vunpack.c.h.b16 %v145
    %v715 = vunpack.c.l.b16 %v146
    %v716 = vunpack.c.h.b16 %v146
    %v717 = vunpack.c.l.b16 %v147
    %v718 = vunpack.c.h.b16 %v147
    %v719 = vunpack.c.l.b16 %v148
    %v720 = vunpack.c.h.b16 %v148
    %v721 = vunpack.c.l.b16 %v149
    %v722 = vunpack.c.h.b16 %v149
    %v723 = vunpack.c.l.b16 %v150
    %v724 = vunpack.c.h.b16 %v150
    %v725 = vunpack.c.l.b16 %v151
    %v726 = vunpack.c.h.b16 %v151
    %v727 = vunpack.c.l.b16 %v152
    %v728 = vunpack.c.h.b16 %v152
    %v729 = vunpack.c.l.b16 %v153
    %v730 = vunpack.c.h.b16 %v153
    %v731 = vunpack.c.l.b16 %v154
    %v732 = vunpack.c.h.b16 %v154
    %v733 = vunpack.c.l.b16 %v155
    %v734 = vunpack.c.h.b16 %v155
    %v735 = vunpack.c.l.b16 %v156
    %v736 = vunpack.c.h.b16 %v156
    %v737 = vunpack.c.l.b16 %v157
    %v738 = vunpack.c.h.b16 %v157
    %v739 = vunpack.c.l.b16 %v158
    %v740 = vunpack.c.h.b16 %v158
    %v741 = vunpack.c.l.b16 %v159
    %v742 = vunpack.c.h.b16 %v159
    %v743 = vunpack.c.l.b16 %v160
    %v744 = vunpack.c.h.b16 %v160
    %v745 = vunpack.c.l.b16 %v161
    %v746 = vunpack.c.h.b16 %v161
    %v747 = vunpack.c.l.b16 %v162
    %v748 = vunpack.c.h.b16 %v162
    %v749 = vunpack.c.l.b16 %v163
    %v750 = vunpack.c.h.b16 %v163
    %v751 = vunpack.c.l.b16 %v164
    %v752 = vunpack.c.h.b16 %v164
    %v753 = vunpack.c.l.b16 %v165
    %v754 = vunpack.c.h.b16 %v165
    %v755 = vunpack.c.l.b16 %v166
    %v756 = vunpack.c.h.b16 %v166
    %v757 = vunpack.c.l.b16 %v167
    %v758 = vunpack.c.h.b16 %v167
    %v759 = vunpack.c.l.b16 %v168
    %v760 = vunpack.c.h.b16 %v168
    %v761 = vunpack.c.l.b16 %v169
    %v762 = vunpack.c.h.b16 %v169
    %v763 = vunpack.c.l.b16 %v170
    %v764 = vunpack.c.h.b16 %v170
    %v765 = vunpack.c.l.b16 %v171
    %v766 = vunpack.c.h.b16 %v171
    %v767 = vunpack.c.l.b16 %v172
    %v768 = vunpack.c.h.b16 %v172
    %v769 = vunpack.c.l.b16 %v173
    %v770 = vunpack.c.h.b16 %v173
    %v771 = vunpack.c.l.b16 %v174
    %v772 = vunpack.c.h.b16 %v174
    %v773 = vunpack.c.l.b16 %v175
    %v774 = vunpack.c.h.b16 %v175
    %v775 = vunpack.c.l.b16 %v176
    %v776 = vunpack.c.h.b16 %v176
    %v777 = vunpack.c.l.b16 %v177
    %v778 = vunpack.c.h.b16 %v177
    %v779 = vunpack.c.l.b16 %v178
    %v780 = vunpack.c.h.b16 %v178
    %v781 = vunpack.c.l.b16 %v179
    %v782 = vunpack.c.h.b16 %v179
    %v783 = vunpack.c.l.b16 %v180
    %v784 = vunpack.c.h.b16 %v180
    %v785 = vunpack.c.l.b16 %v181
    %v786 = vunpack.c.h.b16 %v181
    %v787 = vunpack.c.l.b16 %v182
    %v788 = vunpack.c.h.b16 %v182
    %v789 = vunpack.c.l.b16 %v183
    %v790 = vunpack.c.h.b16 %v183
    %v791 = vunpack.c.l.b16 %v184
    %v792 = vunpack.c.h.b16 %v184
    %v793 = vunpack.c.l.b16 %v185
    %v794 = vunpack.c.h.b16 %v185
    %v795 = vunpack.c.l.b16 %v186
    %v796 = vunpack.c.h.b16 %v186
    %v797 = vunpack.c.l.b16 %v187
    %v798 = vunpack.c.h.b16 %v187
    %v799 = vunpack.c.l.b16 %v188
    %v800 = vunpack.c.h.b16 %v188
    %v801 = vunpack.c.l.b16 %v189
    %v802 = vunpack.c.h.b16 %v189
    %v803 = vunpack.c.l.b16 %v190
    %v804 = vunpack.c.h.b16 %v190
    %v805 = vunpack.c.l.b16 %v191
    %v806 = vunpack.c.h.b16 %v191
    %v807 = vunpack.c.l.b16 %v192
    %v808 = vunpack.c.h.b16 %v192
    %v809 = vunpack.c.l.b16 %v193
    %v810 = vunpack.c.h.b16 %v193
    %v811 = vunpack.c.l.b16 %v194
    %v812 = vunpack.c.h.b16 %v194
    %v813 = vunpack.c.l.b16 %v195
    %v814 = vunpack.c.h.b16 %v195
    %v815 = vunpack.c.l.b16 %v196
    %v816 = vunpack.c.h.b16 %v196
    %v817 = vunpack.c.l.b16 %v197
    %v818 = vunpack.c.h.b16 %v197
    %v819 = vunpack.c.l.b16 %v198
    %v820 = vunpack.c.h.b16 %v198
    %v821 = vunpack.c.l.b16 %v199
    %v822 = vunpack.c.h.b16 %v199
    %v823 = vunpack.c.l.b16 %v200
    %v824 = vunpack.c.h.b16 %v200
    %v825 = vunpack.c.l.b16 %v201
    %v826 = vunpack.c.h.b16 %v201
    %v827 = vunpack.c.l.b16 %v202
    %v828 = vunpack.c.h.b16 %v202
    %v829 = vunpack.c.l.b16 %v203
    %v830 = vunpack.c.h.b16 %v203
    %v831 = vunpack.c.l.b16 %v204
    %v832 = vunpack.c.h.b16 %v204
    %v833 = vunpack.c.l.b16 %v205
    %v834 = vunpack.c.h.b16 %v205
    %v835 = vunpack.c.l.b16 %v206
    %v836 = vunpack.c.h.b16 %v206
    %v837 = vunpack.c.l.b16 %v207
    %v838 = vunpack.c.h.b16 %v207
    %v839 = vunpack.c.l.b16 %v208
    %v840 = vunpack.c.h.b16 %v208
    %v841 = vunpack.c.l.b16 %v209
    %v842 = vunpack.c.h.b16 %v209
    %v843 = vunpack.c.l.b16 %v210
    %v844 = vunpack.c.h.b16 %v210
    %v845 = vunpack.c.l.b16 %v211
    %v846 = vunpack.c.h.b16 %v211
    %v847 = vunpack.c.l.b16 %v212
    %v848 = vunpack.c.h.b16 %v212
    %v849 = vunpack.c.l.b16 %v213
    %v850 = vunpack.c.h.b16 %v213
    %v851 = vunpack.c.l.b16 %v214
    %v852 = vunpack.c.h.b16 %v214
    %v853 = vunpack.c.l.b16 %v215
    %v854 = vunpack.c.h.b16 %v215
    %v855 = vunpack.c.l.b16 %v216
    %v856 = vunpack.c.h.b16 %v216
    %v857 = vunpack.c.l.b16 %v217
    %v858 = vunpack.c.h.b16 %v217
    %v859 = vunpack.c.l.b16 %v218
    %v860 = vunpack.c.h.b16 %v218
    %v861 = vunpack.c.l.b16 %v219
    %v862 = vunpack.c.h.b16 %v219
    %v863 = vunpack.c.l.b16 %v220
    %v864 = vunpack.c.h.b16 %v220
    %v865 = vunpack.c.l.b16 %v221
    %v866 = vunpack.c.h.b16 %v221
    %v867 = vunpack.c.l.b16 %v222
    %v868 = vunpack.c.h.b16 %v222
    %v869 = vunpack.c.l.b16 %v223
    %v870 = vunpack.c.h.b16 %v223
    %v871 = vunpack.c.l.b16 %v224
    %v872 = vunpack.c.h.b16 %v224
    %v873 = vunpack.c.l.b16 %v225
    %v874 = vunpack.c.h.b16 %v225
    %v875 = vunpack.c.l.b16 %v226
    %v876 = vunpack.c.h.b16 %v226
    %v877 = vunpack.c.l.b16 %v227
    %v878 = vunpack.c.h.b16 %v227
    %v879 = vunpack.c.l.b16 %v228
    %v880 = vunpack.c.h.b16 %v228
    %v881 = vunpack.c.l.b16 %v229
    %v882 = vunpack.c.h.b16 %v229
    %v883 = vunpack.c.l.b16 %v230
    %v884 = vunpack.c.h.b16 %v230
    %v885 = vunpack.c.l.b16 %v231
    %v886 = vunpack.c.h.b16 %v231
    %v887 = vunpack.c.l.b16 %v232
    %v888 = vunpack.c.h.b16 %v232
    %v889 = vunpack.c.l.b16 %v233
    %v890 = vunpack.c.h.b16 %v233
    %v891 = vunpack.c.l.b16 %v234
    %v892 = vunpack.c.h.b16 %v234
    %v893 = vunpack.c.l.b16 %v235
    %v894 = vunpack.c.h.b16 %v235
    %v895 = vunpack.c.l.b16 %v236
    %v896 = vunpack.c.h.b16 %v236
    %v897 = vunpack.c.l.b16 %v237
    %v898 = vunpack.c.h.b16 %v237
    %v899 = vunpack.c.l.b16 %v238
    %v900 = vunpack.c.h.b16 %v238
    %v901 = vunpack.c.l.b16 %v239
    %v902 = vunpack.c.h.b16 %v239
    %v903 = vunpack.c.l.b16 %v240
    %v904 = vunpack.c.h.b16 %v240
    %v905 = vunpack.c.l.b16 %v241
    %v906 = vunpack.c.h.b16 %v241
    %v907 = vunpack.c.l.b16 %v242
    %v908 = vunpack.c.h.b16 %v242
    %v909 = vunpack.c.l.b16 %v243
    %v910 = vunpack.c.h.b16 %v243
    %v911 = vunpack.c.l.b16 %v244
    %v912 = vunpack.c.h.b16 %v244
    %v913 = vunpack.c.l.b16 %v245
    %v914 = vunpack.c.h.b16 %v245
    %v915 = vunpack.c.l.b16 %v246
    %v916 = vunpack.c.h.b16 %v246
    %v917 = vunpack.c.l.b16 %v247
    %v918 = vunpack.c.h.b16 %v247
    %v919 = vunpack.c.l.b16 %v248
    %v920 = vunpack.c.h.b16 %v248
    %v921 = vunpack.c.l.b16 %v249
    %v922 = vunpack.c.h.b16 %v249
    %v923 = vunpack.c.l.b16 %v250
    %v924 = vunpack.c.h.b16 %v250
    %v925 = vunpack.c.l.b16 %v251
    %v926 = vunpack.c.h.b16 %v251
    %v927 = vunpack.c.l.b16 %v252
    %v928 = vunpack.c.h.b16 %v252
    %v929 = vunpack.c.l.b16 %v253
    %v930 = vunpack.c.h.b16 %v253
    %v931 = vunpack.c.l.b16 %v254
    %v932 = vunpack.c.h.b16 %v254
    %v933 = vunpack.c.l.b16 %v255
    %v934 = vunpack.c.h.b16 %v255
    %v935 = vunpack.c.l.b16 %v256
    %v936 = vunpack.c.h.b16 %v256
    %v937 = vunpack.c.l.b16 %v257
    %v938 = vunpack.c.h.b16 %v257
    %v939 = vunpack.c.l.b16 %v258
    %v940 = vunpack.c.h.b16 %v258
    %v941 = vunpack.c.l.b16 %v259
    %v942 = vunpack.c.h.b16 %v259
    %v943 = vunpack.c.l.b16 %v260
    %v944 = vunpack.c.h.b16 %v260
    %v945 = vunpack.c.l.b16 %v261
    %v946 = vunpack.c.h.b16 %v261
    %v947 = vunpack.c.l.b16 %v262
    %v948 = vunpack.c.h.b16 %v262
    %v949 = vunpack.c.l.b16 %v263
    %v950 = vunpack.c.h.b16 %v263
    %v951 = vunpack.c.l.b16 %v264
    %v952 = vunpack.c.h.b16 %v264
    %v953 = vunpack.c.l.b16 %v265
    %v954 = vunpack.c.h.b16 %v265
    %v955 = vunpack.c.l.b16 %v266
    %v956 = vunpack.c.h.b16 %v266
    %v957 = vunpack.c.l.b16 %v267
    %v958 = vunpack.c.h.b16 %v267
    %v959 = vunpack.c.l.b16 %v268
    %v960 = vunpack.c.h.b16 %v268
    %v961 = vunpack.c.l.b16 %v269
    %v962 = vunpack.c.h.b16 %v269
    %v963 = vunpack.c.l.b16 %v270
    %v964 = vunpack.c.h.b16 %v270
    %v965 = vunpack.c.l.b16 %v271
    %v966 = vunpack.c.h.b16 %v271
    %v967 = vunpack.c.l.b16 %v272
    %v968 = vunpack.c.h.b16 %v272
    %v969 = vunpack.c.l.b16 %v273
    %v970 = vunpack.c.h.b16 %v273
    %v971 = vunpack.c.l.b16 %v274
    %v972 = vunpack.c.h.b16 %v274
    %v973 = vunpack.c.l.b16 %v275
    %v974 = vunpack.c.h.b16 %v275
    %v975 = vunpack.c.l.b16 %v276
    %v976 = vunpack.c.h.b16 %v276
    %v977 = vunpack.c.l.b16 %v277
    %v978 = vunpack.c.h.b16 %v277
    %v979 = vunpack.c.l.b16 %v278
    %v980 = vunpack.c.h.b16 %v278
    %v981 = vunpack.c.l.b16 %v279
    %v982 = vunpack.c.h.b16 %v279
    %v983 = vunpack.c.l.b16 %v280
    %v984 = vunpack.c.h.b16 %v280
    %v985 = vunpack.c.l.b16 %v281
    %v986 = vunpack.c.h.b16 %v281
    %v987 = vunpack.c.l.b16 %v282
    %v988 = vunpack.c.h.b16 %v282
    %v989 = vunpack.c.l.b16 %v283
    %v990 = vunpack.c.h.b16 %v283
    %v991 = vunpack.c.l.b16 %v284
    %v992 = vunpack.c.h.b16 %v284
    %v993 = vunpack.c.l.b16 %v285
    %v994 = vunpack.c.h.b16 %v285
    %v995 = vunpack.c.l.b16 %v286
    %v996 = vunpack.c.h.b16 %v286
    %v997 = vunpack.c.l.b16 %v287
    %v998 = vunpack.c.h.b16 %v287
    %v999 = vunpack.c.l.b16 %v288
    %v1000 = vunpack.c.h.b16 %v288
    %v1001 = vunpack.c.l.b16 %v289
    %v1002 = vunpack.c.h.b16 %v289
    %v1003 = vunpack.c.l.b16 %v290
    %v1004 = vunpack.c.h.b16 %v290
    %v1005 = vunpack.c.l.b16 %v291
    %v1006 = vunpack.c.h.b16 %v291
    %v1007 = vunpack.c.l.b16 %v292
    %v1008 = vunpack.c.h.b16 %v292
    %v1009 = vunpack.c.l.b16 %v293
    %v1010 = vunpack.c.h.b16 %v293
    %v1011 = vunpack.c.l.b16 %v294
    %v1012 = vunpack.c.h.b16 %v294
    %v1013 = vunpack.c.l.b16 %v295
    %v1014 = vunpack.c.h.b16 %v295
    %v1015 = vunpack.c.l.b16 %v296
    %v1016 = vunpack.c.h.b16 %v296
    %v1017 = vunpack.c.l.b16 %v297
    %v1018 = vunpack.c.h.b16 %v297
    %v1019 = vunpack.c.l.b16 %v298
    %v1020 = vunpack.c.h.b16 %v298
    %v1021 = vunpack.c.l.b16 %v299
    %v1022 = vunpack.c.h.b16 %v299
    %v1023 = vunpack.c.l.b16 %v300
    %v1024 = vunpack.c.h.b16 %v300
    %v1025 = vunpack.c.l.b16 %v301
    %v1026 = vunpack.c.h.b16 %v301
    %v1027 = vunpack.c.l.b16 %v302
    %v1028 = vunpack.c.h.b16 %v302
    %v1029 = vunpack.c.l.b16 %v303
    %v1030 = vunpack.c.h.b16 %v303
    %v1031 = vunpack.c.l.b16 %v304
    %v1032 = vunpack.c.h.b16 %v304
    %v1033 = vunpack.c.l.b16 %v305
    %v1034 = vunpack.c.h.b16 %v305
    %v1035 = vunpack.c.l.b16 %v306
    %v1036 = vunpack.c.h.b16 %v306
    %v1037 = vunpack.c.l.b16 %v307
    %v1038 = vunpack.c.h.b16 %v307
    %v1039 = vunpack.c.l.b16 %v308
    %v1040 = vunpack.c.h.b16 %v308
    %v1041 = vunpack.c.l.b16 %v309
    %v1042 = vunpack.c.h.b16 %v309
    %v1043 = vunpack.c.l.b16 %v310
    %v1044 = vunpack.c.h.b16 %v310
    %v1045 = vunpack.c.l.b16 %v311
    %v1046 = vunpack.c.h.b16 %v311
    %v1047 = vunpack.c.l.b16 %v312
    %v1048 = vunpack.c.h.b16 %v312
    %v1049 = vunpack.c.l.b16 %v313
    %v1050 = vunpack.c.h.b16 %v313
    %v1051 = vunpack.c.l.b16 %v314
    %v1052 = vunpack.c.h.b16 %v314
    %v1053 = vunpack.c.l.b16 %v315
    %v1054 = vunpack.c.h.b16 %v315
    %v1055 = vunpack.c.l.b16 %v316
    %v1056 = vunpack.c.h.b16 %v316
    %v1057 = vunpack.c.l.b16 %v317
    %v1058 = vunpack.c.h.b16 %v317
    %v1059 = vunpack.c.l.b16 %v318
    %v1060 = vunpack.c.h.b16 %v318
    %v1061 = vunpack.c.l.b16 %v319
    %v1062 = vunpack.c.h.b16 %v319
    %v1063 = vunpack.c.l.b16 %v320
    %v1064 = vunpack.c.h.b16 %v320
    %v1065 = vunpack.c.l.b16 %v321
    %v1066 = vunpack.c.h.b16 %v321
    %v1067 = vunpack.c.l.b16 %v322
    %v1068 = vunpack.c.h.b16 %v322
    %v1069 = vunpack.c.l.b16 %v323
    %v1070 = vunpack.c.h.b16 %v323
    %v1071 = vunpack.c.l.b16 %v324
    %v1072 = vunpack.c.h.b16 %v324
    %v1073 = vunpack.c.l.b16 %v325
    %v1074 = vunpack.c.h.b16 %v325
    %v1075 = vunpack.c.l.b16 %v326
    %v1076 = vunpack.c.h.b16 %v326
    %v1077 = vunpack.c.l.b16 %v327
    %v1078 = vunpack.c.h.b16 %v327
    %v1079 = vunpack.c.l.b16 %v328
    %v1080 = vunpack.c.h.b16 %v328
    %v1081 = vunpack.c.l.b16 %v329
    %v1082 = vunpack.c.h.b16 %v329
    %v1083 = vunpack.c.l.b16 %v330
    %v1084 = vunpack.c.h.b16 %v330
    %v1085 = vunpack.c.l.b16 %v331
    %v1086 = vunpack.c.h.b16 %v331
    %v1087 = vunpack.c.l.b16 %v332
    %v1088 = vunpack.c.h.b16 %v332
    %v1089 = vunpack.c.l.b16 %v333
    %v1090 = vunpack.c.h.b16 %v333
    %v1091 = vunpack.c.l.b16 %v334
    %v1092 = vunpack.c.h.b16 %v334
    %v1093 = vunpack.c.l.b16 %v335
    %v1094 = vunpack.c.h.b16 %v335
    %v1095 = vunpack.c.l.b16 %v336
    %v1096 = vunpack.c.h.b16 %v336
    %v1097 = vunpack.c.l.b16 %v337
    %v1098 = vunpack.c.h.b16 %v337
    %v1099 = vunpack.c.l.b16 %v338
    %v1100 = vunpack.c.h.b16 %v338
    %v1101 = vunpack.c.l.b16 %v339
    %v1102 = vunpack.c.h.b16 %v339
    %v1103 = vunpack.c.l.b16 %v340
    %v1104 = vunpack.c.h.b16 %v340
    %v1105 = vunpack.c.l.b16 %v341
    %v1106 = vunpack.c.h.b16 %v341
    %v1107 = vunpack.c.l.b16 %v342
    %v1108 = vunpack.c.h.b16 %v342
    %v1109 = vunpack.c.l.b16 %v343
    %v1110 = vunpack.c.h.b16 %v343
    %v1111 = vunpack.c.l.b16 %v344
    %v1112 = vunpack.c.h.b16 %v344
    %v1113 = vunpack.c.l.b16 %v345
    %v1114 = vunpack.c.h.b16 %v345
    %v1115 = vunpack.c.l.b16 %v346
    %v1116 = vunpack.c.h.b16 %v346
    %v1117 = vunpack.c.l.b16 %v347
    %v1118 = vunpack.c.h.b16 %v347
    %v1119 = vunpack.c.l.b16 %v348
    %v1120 = vunpack.c.h.b16 %v348
    %v1121 = vunpack.c.l.b16 %v349
    %v1122 = vunpack.c.h.b16 %v349
    %v1123 = vunpack.c.l.b16 %v350
    %v1124 = vunpack.c.h.b16 %v350
    %v1125 = vpack.c.b16 %v617, %v613
    %v1126 = vpack.c.b16 %v618, %v614
    %v1127 = vpack.c.b16 %v619, %v615
    %v1128 = vpack.c.b16 %v620, %v616
    %v1129 = vpack.c.b16 %v625, %v621
    %v1130 = vpack.c.b16 %v626, %v622
    %v1131 = vpack.c.b16 %v627, %v623
    %v1132 = vpack.c.b16 %v628, %v624
    %v1133 = vpack.c.b16 %v633, %v629
    %v1134 = vpack.c.b16 %v634, %v630
    %v1135 = vpack.c.b16 %v635, %v631
    %v1136 = vpack.c.b16 %v636, %v632
    %v1137 = vpack.c.b16 %v641, %v637
    %v1138 = vpack.c.b16 %v642, %v638
    %v1139 = vpack.c.b16 %v643, %v639
    %v1140 = vpack.c.b16 %v644, %v640
    %v1141 = vpack.c.b16 %v649, %v645
    %v1142 = vpack.c.b16 %v650, %v646
    %v1143 = vpack.c.b16 %v651, %v647
    %v1144 = vpack.c.b16 %v652, %v648
    %v1145 = vpack.c.b16 %v657, %v653
    %v1146 = vpack.c.b16 %v658, %v654
    %v1147 = vpack.c.b16 %v659, %v655
    %v1148 = vpack.c.b16 %v660, %v656
    %v1149 = vpack.c.b16 %v665, %v661
    %v1150 = vpack.c.b16 %v666, %v662
    %v1151 = vpack.c.b16 %v667, %v663
    %v1152 = vpack.c.b16 %v668, %v664
    %v1153 = vpack.c.b16 %v673, %v669
    %v1154 = vpack.c.b16 %v674, %v670
    %v1155 = vpack.c.b16 %v675, %v671
    %v1156 = vpack.c.b16 %v676, %v672
    %v1157 = vpack.c.b16 %v681, %v677
    %v1158 = vpack.c.b16 %v682, %v678
    %v1159 = vpack.c.b16 %v683, %v679
    %v1160 = vpack.c.b16 %v684, %v680
    %v1161 = vpack.c.b16 %v689, %v685
    %v1162 = vpack.c.b16 %v690, %v686
    %v1163 = vpack.c.b16 %v691, %v687
    %v1164 = vpack.c.b16 %v692, %v688
    %v1165 = vpack.c.b16 %v697, %v693
    %v1166 = vpack.c.b16 %v698, %v694
    %v1167 = vpack.c.b16 %v699, %v695
    %v1168 = vpack.c.b16 %v700, %v696
    %v1169 = vpack.c.b16 %v705, %v701
    %v1170 = vpack.c.b16 %v706, %v702
    %v1171 = vpack.c.b16 %v707, %v703
    %v1172 = vpack.c.b16 %v708, %v704
    %v1173 = vpack.c.b16 %v713, %v709
    %v1174 = vpack.c.b16 %v714, %v710
    %v1175 = vpack.c.b16 %v715, %v711
    %v1176 = vpack.c.b16 %v716, %v712
    %v1177 = vpack.c.b16 %v721, %v717
    %v1178 = vpack.c.b16 %v722, %v718
    %v1179 = vpack.c.b16 %v723, %v719
    %v1180 = vpack.c.b16 %v724, %v720
    %v1181 = vpack.c.b16 %v729, %v725
    %v1182 = vpack.c.b16 %v730, %v726
    %v1183 = vpack.c.b16 %v731, %v727
    %v1184 = vpack.c.b16 %v732, %v728
    %v1185 = vpack.c.b16 %v737, %v733
    %v1186 = vpack.c.b16 %v738, %v734
    %v1187 = vpack.c.b16 %v739, %v735
    %v1188 = vpack.c.b16 %v740, %v736
    %v1189 = vpack.c.b16 %v745, %v741
    %v1190 = vpack.c.b16 %v746, %v742
    %v1191 = vpack.c.b16 %v747, %v743
    %v1192 = vpack.c.b16 %v748, %v744
    %v1193 = vpack.c.b16 %v753, %v749
    %v1194 = vpack.c.b16 %v754, %v750
    %v1195 = vpack.c.b16 %v755, %v751
    %v1196 = vpack.c.b16 %v756, %v752
    %v1197 = vpack.c.b16 %v761, %v757
    %v1198 = vpack.c.b16 %v762, %v758
    %v1199 = vpack.c.b16 %v763, %v759
    %v1200 = vpack.c.b16 %v764, %v760
    %v1201 = vpack.c.b16 %v769, %v765
    %v1202 = vpack.c.b16 %v770, %v766
    %v1203 = vpack.c.b16 %v771, %v767
    %v1204 = vpack.c.b16 %v772, %v768
    %v1205 = vpack.c.b16 %v777, %v773
    %v1206 = vpack.c.b16 %v778, %v774
    %v1207 = vpack.c.b16 %v779, %v775
    %v1208 = vpack.c.b16 %v780, %v776
    %v1209 = vpack.c.b16 %v785, %v781
    %v1210 = vpack.c.b16 %v786, %v782
    %v1211 = vpack.c.b16 %v787, %v783
    %v1212 = vpack.c.b16 %v788, %v784
    %v1213 = vpack.c.b16 %v793, %v789
    %v1214 = vpack.c.b16 %v794, %v790
    %v1215 = vpack.c.b16 %v795, %v791
    %v1216 = vpack.c.b16 %v796, %v792
    %v1217 = vpack.c.b16 %v801, %v797
    %v1218 = vpack.c.b16 %v802, %v798
    %v1219 = vpack.c.b16 %v803, %v799
    %v1220 = vpack.c.b16 %v804, %v800
    %v1221 = vpack.c.b16 %v809, %v805
    %v1222 = vpack.c.b16 %v810, %v806
    %v1223 = vpack.c.b16 %v811, %v807
    %v1224 = vpack.c.b16 %v812, %v808
    %v1225 = vpack.c.b16 %v817, %v813
    %v1226 = vpack.c.b16 %v818, %v814
    %v1227 = vpack.c.b16 %v819, %v815
    %v1228 = vpack.c.b16 %v820, %v816
    %v1229 = vpack.c.b16 %v825, %v821
    %v1230 = vpack.c.b16 %v826, %v822
    %v1231 = vpack.c.b16 %v827, %v823
    %v1232 = vpack.c.b16 %v828, %v824
    %v1233 = vpack.c.b16 %v833, %v829
    %v1234 = vpack.c.b16 %v834, %v830
    %v1235 = vpack.c.b16 %v835, %v831
    %v1236 = vpack.c.b16 %v836, %v832
    %v1237 = vpack.c.b16 %v841, %v837
    %v1238 = vpack.c.b16 %v842, %v838
    %v1239 = vpack.c.b16 %v843, %v839
    %v1240 = vpack.c.b16 %v844, %v840
    %v1241 = vpack.c.b16 %v849, %v845
    %v1242 = vpack.c.b16 %v850, %v846
    %v1243 = vpack.c.b16 %v851, %v847
    %v1244 = vpack.c.b16 %v852, %v848
    %v1245 = vpack.c.b16 %v857, %v853
    %v1246 = vpack.c.b16 %v858, %v854
    %v1247 = vpack.c.b16 %v859, %v855
    %v1248 = vpack.c.b16 %v860, %v856
    %v1249 = vpack.c.b16 %v865, %v861
    %v1250 = vpack.c.b16 %v866, %v862
    %v1251 = vpack.c.b16 %v867, %v863
    %v1252 = vpack.c.b16 %v868, %v864
    %v1253 = vpack.c.b16 %v873, %v869
    %v1254 = vpack.c.b16 %v874, %v870
    %v1255 = vpack.c.b16 %v875, %v871
    %v1256 = vpack.c.b16 %v876, %v872
    %v1257 = vpack.c.b16 %v881, %v877
    %v1258 = vpack.c.b16 %v882, %v878
    %v1259 = vpack.c.b16 %v883, %v879
    %v1260 = vpack.c.b16 %v884, %v880
    %v1261 = vpack.c.b16 %v889, %v885
    %v1262 = vpack.c.b16 %v890, %v886
    %v1263 = vpack.c.b16 %v891, %v887
    %v1264 = vpack.c.b16 %v892, %v888
    %v1265 = vpack.c.b16 %v897, %v893
    %v1266 = vpack.c.b16 %v898, %v894
    %v1267 = vpack.c.b16 %v899, %v895
    %v1268 = vpack.c.b16 %v900, %v896
    %v1269 = vpack.c.b16 %v905, %v901
    %v1270 = vpack.c.b16 %v906, %v902
    %v1271 = vpack.c.b16 %v907, %v903
    %v1272 = vpack.c.b16 %v908, %v904
    %v1273 = vpack.c.b16 %v913, %v909
    %v1274 = vpack.c.b16 %v914, %v910
    %v1275 = vpack.c.b16 %v915, %v911
    %v1276 = vpack.c.b16 %v916, %v912
    %v1277 = vpack.c.b16 %v921, %v917
    %v1278 = vpack.c.b16 %v922, %v918
    %v1279 = vpack.c.b16 %v923, %v919
    %v1280 = vpack.c.b16 %v924, %v920
    %v1281 = vpack.c.b16 %v929, %v925
    %v1282 = vpack.c.b16 %v930, %v926
    %v1283 = vpack.c.b16 %v931, %v927
    %v1284 = vpack.c.b16 %v932, %v928
    %v1285 = vpack.c.b16 %v937, %v933
    %v1286 = vpack.c.b16 %v938, %v934
    %v1287 = vpack.c.b16 %v939, %v935
    %v1288 = vpack.c.b16 %v940, %v936
    %v1289 = vpack.c.b16 %v945, %v941
    %v1290 = vpack.c.b16 %v946, %v942
    %v1291 = vpack.c.b16 %v947, %v943
    %v1292 = vpack.c.b16 %v948, %v944
    %v1293 = vpack.c.b16 %v953, %v949
    %v1294 = vpack.c.b16 %v954, %v950
    %v1295 = vpack.c.b16 %v955, %v951
    %v1296 = vpack.c.b16 %v956, %v952
    %v1297 = vpack.c.b16 %v961, %v957
    %v1298 = vpack.c.b16 %v962, %v958
    %v1299 = vpack.c.b16 %v963, %v959
    %v1300 = vpack.c.b16 %v964, %v960
    %v1301 = vpack.c.b16 %v969, %v965
    %v1302 = vpack.c.b16 %v970, %v966
    %v1303 = vpack.c.b16 %v971, %v967
    %v1304 = vpack.c.b16 %v972, %v968
    %v1305 = vpack.c.b16 %v977, %v973
    %v1306 = vpack.c.b16 %v978, %v974
    %v1307 = vpack.c.b16 %v979, %v975
    %v1308 = vpack.c.b16 %v980, %v976
    %v1309 = vpack.c.b16 %v985, %v981
    %v1310 = vpack.c.b16 %v986, %v982
    %v1311 = vpack.c.b16 %v987, %v983
    %v1312 = vpack.c.b16 %v988, %v984
    %v1313 = vpack.c.b16 %v993, %v989
    %v1314 = vpack.c.b16 %v994, %v990
    %v1315 = vpack.c.b16 %v995, %v991
    %v1316 = vpack.c.b16 %v996, %v992
    %v1317 = vpack.c.b16 %v1001, %v997
    %v1318 = vpack.c.b16 %v1002, %v998
    %v1319 = vpack.c.b16 %v1003, %v999
    %v1320 = vpack.c.b16 %v1004, %v1000
    %v1321 = vpack.c.b16 %v1009, %v1005
    %v1322 = vpack.c.b16 %v1010, %v1006
    %v1323 = vpack.c.b16 %v1011, %v1007
    %v1324 = vpack.c.b16 %v1012, %v1008
    %v1325 = vpack.c.b16 %v1017, %v1013
    %v1326 = vpack.c.b16 %v1018, %v1014
    %v1327 = vpack.c.b16 %v1019, %v1015
    %v1328 = vpack.c.b16 %v1020, %v1016
    %v1329 = vpack.c.b16 %v1025, %v1021
    %v1330 = vpack.c.b16 %v1026, %v1022
    %v1331 = vpack.c.b16 %v1027, %v1023
    %v1332 = vpack.c.b16 %v1028, %v1024
    %v1333 = vpack.c.b16 %v1033, %v1029
    %v1334 = vpack.c.b16 %v1034, %v1030
    %v1335 = vpack.c.b16 %v1035, %v1031
    %v1336 = vpack.c.b16 %v1036, %v1032
    %v1337 = vpack.c.b16 %v1041, %v1037
    %v1338 = vpack.c.b16 %v1042, %v1038
    %v1339 = vpack.c.b16 %v1043, %v1039
    %v1340 = vpack.c.b16 %v1044, %v1040
    %v1341 = vpack.c.b16 %v1049, %v1045
    %v1342 = vpack.c.b16 %v1050, %v1046
    %v1343 = vpack.c.b16 %v1051, %v1047
    %v1344 = vpack.c.b16 %v1052, %v1048
    %v1345 = vpack.c.b16 %v1057, %v1053
    %v1346 = vpack.c.b16 %v1058, %v1054
    %v1347 = vpack.c.b16 %v1059, %v1055
    %v1348 = vpack.c.b16 %v1060, %v1056
    %v1349 = vpack.c.b16 %v1065, %v1061
    %v1350 = vpack.c.b16 %v1066, %v1062
    %v1351 = vpack.c.b16 %v1067, %v1063
    %v1352 = vpack.c.b16 %v1068, %v1064
    %v1353 = vpack.c.b16 %v1073, %v1069
    %v1354 = vpack.c.b16 %v1074, %v1070
    %v1355 = vpack.c.b16 %v1075, %v1071
    %v1356 = vpack.c.b16 %v1076, %v1072
    %v1357 = vpack.c.b16 %v1081, %v1077
    %v1358 = vpack.c.b16 %v1082, %v1078
    %v1359 = vpack.c.b16 %v1083, %v1079
    %v1360 = vpack.c.b16 %v1084, %v1080
    %v1361 = vpack.c.b16 %v1089, %v1085
    %v1362 = vpack.c.b16 %v1090, %v1086
    %v1363 = vpack.c.b16 %v1091, %v1087
    %v1364 = vpack.c.b16 %v1092, %v1088
    %v1365 = vpack.c.b16 %v1097, %v1093
    %v1366 = vpack.c.b16 %v1098, %v1094
    %v1367 = vpack.c.b16 %v1099, %v1095
    %v1368 = vpack.c.b16 %v1100, %v1096
    %v1369 = vpack.c.b16 %v1105, %v1101
    %v1370 = vpack.c.b16 %v1106, %v1102
    %v1371 = vpack.c.b16 %v1107, %v1103
    %v1372 = vpack.c.b16 %v1108, %v1104
    %v1373 = vpack.c.b16 %v1113, %v1109
    %v1374 = vpack.c.b16 %v1114, %v1110
    %v1375 = vpack.c.b16 %v1115, %v1111
    %v1376 = vpack.c.b16 %v1116, %v1112
    %v1377 = vpack.c.b16 %v1121, %v1117
    %v1378 = vpack.c.b16 %v1122, %v1118
    %v1379 = vpack.c.b16 %v1123, %v1119
    %v1380 = vpack.c.b16 %v1124, %v1120
    %1637 = vmatprep.subr.bf16.mxu0 %v1126
    %1638 = vmatpush1.bf16.msra.mxu0 %v1125
    %1639 = vmatprep.subr.bf16.mxu0 %v1130
    %1640 = vmatpush1.bf16.msra.mxu0 %v1129
    %1641 = vmatprep.subr.bf16.mxu0 %v1134
    %1642 = vmatpush1.bf16.msra.mxu0 %v1133
    %1643 = vmatprep.subr.bf16.mxu0 %v1138
    %1644 = vmatpush1.bf16.msra.mxu0 %v1137
    %1645 = vmatprep.subr.bf16.mxu0 %v1142
    %1646 = vmatpush1.bf16.msra.mxu0 %v1141
    %1647 = vmatprep.subr.bf16.mxu0 %v1146
    %1648 = vmatpush1.bf16.msra.mxu0 %v1145
    %1649 = vmatprep.subr.bf16.mxu0 %v1150
    %1650 = vmatpush1.bf16.msra.mxu0 %v1149
    %1651 = vmatprep.subr.bf16.mxu0 %v1154
    %1652 = vmatpush1.bf16.msra.mxu0 %v1153
    %1653 = vmatprep.subr.bf16.mxu0 %v1158
    %1654 = vmatpush1.bf16.msra.mxu0 %v1157
    %1655 = vmatprep.subr.bf16.mxu0 %v1162
    %1656 = vmatpush1.bf16.msra.mxu0 %v1161
    %1657 = vmatprep.subr.bf16.mxu0 %v1166
    %1658 = vmatpush1.bf16.msra.mxu0 %v1165
    %1659 = vmatprep.subr.bf16.mxu0 %v1170
    %1660 = vmatpush1.bf16.msra.mxu0 %v1169
    %1661 = vmatprep.subr.bf16.mxu0 %v1174
    %1662 = vmatpush1.bf16.msra.mxu0 %v1173
    %1663 = vmatprep.subr.bf16.mxu0 %v1178
    %1664 = vmatpush1.bf16.msra.mxu0 %v1177
    %1665 = vmatprep.subr.bf16.mxu0 %v1182
    %1666 = vmatpush1.bf16.msra.mxu0 %v1181
    %1667 = vmatprep.subr.bf16.mxu0 %v1186
    %1668 = vmatpush1.bf16.msra.mxu0 %v1185
    %1669 = vmatprep.mubr.bf16.mxu0 %v88
    %1670 = vmatmul.mubr.bf16.gmra.mrb[0].mxu0 %v87
    %v1671 = vpop.f32.mrb[0].mxu0
    %v1672 = vadd.f32 %v353, %v1671
    %v1673 = vpop.f32.mrb[0].mxu0
    %v1674 = vadd.f32 %v354, %v1673
    %v1675 = vpop.f32.mrb[0].mxu0
    %v1676 = vpop.f32.mrb[0].mxu0
    %1677 = vdwg.mxu0
    %1678 = vmatprep.subr.bf16.mxu0 %v1190
    %1679 = vmatpush1.bf16.msra.mxu0 %v1189
    %1680 = vmatprep.subr.bf16.mxu0 %v1194
    %1681 = vmatpush1.bf16.msra.mxu0 %v1193
    %1682 = vmatprep.subr.bf16.mxu0 %v1198
    %1683 = vmatpush1.bf16.msra.mxu0 %v1197
    %1684 = vmatprep.subr.bf16.mxu0 %v1202
    %1685 = vmatpush1.bf16.msra.mxu0 %v1201
    %1686 = vmatprep.subr.bf16.mxu0 %v1206
    %1687 = vmatpush1.bf16.msra.mxu0 %v1205
    %1688 = vmatprep.subr.bf16.mxu0 %v1210
    %1689 = vmatpush1.bf16.msra.mxu0 %v1209
    %1690 = vmatprep.subr.bf16.mxu0 %v1214
    %1691 = vmatpush1.bf16.msra.mxu0 %v1213
    %1692 = vmatprep.subr.bf16.mxu0 %v1218
    %1693 = vmatpush1.bf16.msra.mxu0 %v1217
    %1694 = vmatprep.subr.bf16.mxu0 %v1222
    %1695 = vmatpush1.bf16.msra.mxu0 %v1221
    %1696 = vmatprep.subr.bf16.mxu0 %v1226
    %1697 = vmatpush1.bf16.msra.mxu0 %v1225
    %1698 = vmatprep.subr.bf16.mxu0 %v1230
    %1699 = vmatpush1.bf16.msra.mxu0 %v1229
    %1700 = vmatprep.subr.bf16.mxu0 %v1234
    %1701 = vmatpush1.bf16.msra.mxu0 %v1233
    %1702 = vmatprep.subr.bf16.mxu0 %v1238
    %1703 = vmatpush1.bf16.msra.mxu0 %v1237
    %1704 = vmatprep.subr.bf16.mxu0 %v1242
    %1705 = vmatpush1.bf16.msra.mxu0 %v1241
    %1706 = vmatprep.subr.bf16.mxu0 %v1246
    %1707 = vmatpush1.bf16.msra.mxu0 %v1245
    %1708 = vmatprep.subr.bf16.mxu0 %v1250
    %1709 = vmatpush1.bf16.msra.mxu0 %v1249
    %1710 = vmatprep.mubr.bf16.mxu0 %v90
    %1711 = vmatmul.mubr.bf16.gmra.mrb[0].mxu0 %v89
    %v1712 = vpop.f32.mrb[0].mxu0
    %v1713 = vadd.f32 %v1672, %v1712
    %v1714 = vpop.f32.mrb[0].mxu0
    %v1715 = vadd.f32 %v1674, %v1714
    %v1716 = vpop.f32.mrb[0].mxu0
    %v1717 = vpop.f32.mrb[0].mxu0
    %1718 = vdwg.mxu0
    %1719 = vmatprep.subr.bf16.mxu0 %v1254
    %1720 = vmatpush1.bf16.msra.mxu0 %v1253
    %1721 = vmatprep.subr.bf16.mxu0 %v1258
    %1722 = vmatpush1.bf16.msra.mxu0 %v1257
    %1723 = vmatprep.subr.bf16.mxu0 %v1262
    %1724 = vmatpush1.bf16.msra.mxu0 %v1261
    %1725 = vmatprep.subr.bf16.mxu0 %v1266
    %1726 = vmatpush1.bf16.msra.mxu0 %v1265
    %1727 = vmatprep.subr.bf16.mxu0 %v1270
    %1728 = vmatpush1.bf16.msra.mxu0 %v1269
    %1729 = vmatprep.subr.bf16.mxu0 %v1274
    %1730 = vmatpush1.bf16.msra.mxu0 %v1273
    %1731 = vmatprep.subr.bf16.mxu0 %v1278
    %1732 = vmatpush1.bf16.msra.mxu0 %v1277
    %1733 = vmatprep.subr.bf16.mxu0 %v1282
    %1734 = vmatpush1.bf16.msra.mxu0 %v1281
    %1735 = vmatprep.subr.bf16.mxu0 %v1286
    %1736 = vmatpush1.bf16.msra.mxu0 %v1285
    %1737 = vmatprep.subr.bf16.mxu0 %v1290
    %1738 = vmatpush1.bf16.msra.mxu0 %v1289
    %1739 = vmatprep.subr.bf16.mxu0 %v1294
    %1740 = vmatpush1.bf16.msra.mxu0 %v1293
    %1741 = vmatprep.subr.bf16.mxu0 %v1298
    %1742 = vmatpush1.bf16.msra.mxu0 %v1297
    %1743 = vmatprep.subr.bf16.mxu0 %v1302
    %1744 = vmatpush1.bf16.msra.mxu0 %v1301
    %1745 = vmatprep.subr.bf16.mxu0 %v1306
    %1746 = vmatpush1.bf16.msra.mxu0 %v1305
    %1747 = vmatprep.subr.bf16.mxu0 %v1310
    %1748 = vmatpush1.bf16.msra.mxu0 %v1309
    %1749 = vmatprep.subr.bf16.mxu0 %v1314
    %1750 = vmatpush1.bf16.msra.mxu0 %v1313
    %1751 = vmatprep.mubr.bf16.mxu0 %v92
    %1752 = vmatmul.mubr.bf16.gmra.mrb[0].mxu0 %v91
    %v1753 = vpop.f32.mrb[0].mxu0
    %v1754 = vadd.f32 %v1713, %v1753
    %v1755 = vpop.f32.mrb[0].mxu0
    %v1756 = vadd.f32 %v1715, %v1755
    %v1757 = vpop.f32.mrb[0].mxu0
    %v1758 = vpop.f32.mrb[0].mxu0
    %1759 = vdwg.mxu0
    %1760 = vmatprep.subr.bf16.mxu0 %v1318
    %1761 = vmatpush1.bf16.msra.mxu0 %v1317
    %1762 = vmatprep.subr.bf16.mxu0 %v1322
    %1763 = vmatpush1.bf16.msra.mxu0 %v1321
    %1764 = vmatprep.subr.bf16.mxu0 %v1326
    %1765 = vmatpush1.bf16.msra.mxu0 %v1325
    %1766 = vmatprep.subr.bf16.mxu0 %v1330
    %1767 = vmatpush1.bf16.msra.mxu0 %v1329
    %1768 = vmatprep.subr.bf16.mxu0 %v1334
    %1769 = vmatpush1.bf16.msra.mxu0 %v1333
    %1770 = vmatprep.subr.bf16.mxu0 %v1338
    %1771 = vmatpush1.bf16.msra.mxu0 %v1337
    %1772 = vmatprep.subr.bf16.mxu0 %v1342
    %1773 = vmatpush1.bf16.msra.mxu0 %v1341
    %1774 = vmatprep.subr.bf16.mxu0 %v1346
    %1775 = vmatpush1.bf16.msra.mxu0 %v1345
    %1776 = vmatprep.subr.bf16.mxu0 %v1350
    %1777 = vmatpush1.bf16.msra.mxu0 %v1349
    %1778 = vmatprep.subr.bf16.mxu0 %v1354
    %1779 = vmatpush1.bf16.msra.mxu0 %v1353
    %1780 = vmatprep.subr.bf16.mxu0 %v1358
    %1781 = vmatpush1.bf16.msra.mxu0 %v1357
    %1782 = vmatprep.subr.bf16.mxu0 %v1362
    %1783 = vmatpush1.bf16.msra.mxu0 %v1361
    %1784 = vmatprep.subr.bf16.mxu0 %v1366
    %1785 = vmatpush1.bf16.msra.mxu0 %v1365
    %1786 = vmatprep.subr.bf16.mxu0 %v1370
    %1787 = vmatpush1.bf16.msra.mxu0 %v1369
    %1788 = vmatprep.subr.bf16.mxu0 %v1374
    %1789 = vmatpush1.bf16.msra.mxu0 %v1373
    %1790 = vmatprep.subr.bf16.mxu0 %v1378
    %1791 = vmatpush1.bf16.msra.mxu0 %v1377
    %1792 = vmatprep.mubr.bf16.mxu0 %v94
    %1793 = vmatmul.mubr.bf16.gmra.mrb[0].mxu0 %v93
    %v1794 = vpop.f32.mrb[0].mxu0
    %v1795 = vadd.f32 %v1754, %v1794
    %v1796 = vpop.f32.mrb[0].mxu0
    %v1797 = vadd.f32 %v1756, %v1796
    %v1798 = vpop.f32.mrb[0].mxu0
    %v1799 = vpop.f32.mrb[0].mxu0
    %1800 = vdwg.mxu0
    %1801 = vmatprep.subr.bf16.mxu0 %v1128
    %1802 = vmatpush1.bf16.msra.mxu0 %v1127
    %1803 = vmatprep.subr.bf16.mxu0 %v1132
    %1804 = vmatpush1.bf16.msra.mxu0 %v1131
    %1805 = vmatprep.subr.bf16.mxu0 %v1136
    %1806 = vmatpush1.bf16.msra.mxu0 %v1135
    %1807 = vmatprep.subr.bf16.mxu0 %v1140
    %1808 = vmatpush1.bf16.msra.mxu0 %v1139
    %1809 = vmatprep.subr.bf16.mxu0 %v1144
    %1810 = vmatpush1.bf16.msra.mxu0 %v1143
    %1811 = vmatprep.subr.bf16.mxu0 %v1148
    %1812 = vmatpush1.bf16.msra.mxu0 %v1147
    %1813 = vmatprep.subr.bf16.mxu0 %v1152
    %1814 = vmatpush1.bf16.msra.mxu0 %v1151
    %1815 = vmatprep.subr.bf16.mxu0 %v1156
    %1816 = vmatpush1.bf16.msra.mxu0 %v1155
    %1817 = vmatprep.subr.bf16.mxu0 %v1160
    %1818 = vmatpush1.bf16.msra.mxu0 %v1159
    %1819 = vmatprep.subr.bf16.mxu0 %v1164
    %1820 = vmatpush1.bf16.msra.mxu0 %v1163
    %1821 = vmatprep.subr.bf16.mxu0 %v1168
    %1822 = vmatpush1.bf16.msra.mxu0 %v1167
    %1823 = vmatprep.subr.bf16.mxu0 %v1172
    %1824 = vmatpush1.bf16.msra.mxu0 %v1171
    %1825 = vmatprep.subr.bf16.mxu0 %v1176
    %1826 = vmatpush1.bf16.msra.mxu0 %v1175
    %1827 = vmatprep.subr.bf16.mxu0 %v1180
    %1828 = vmatpush1.bf16.msra.mxu0 %v1179
    %1829 = vmatprep.subr.bf16.mxu0 %v1184
    %1830 = vmatpush1.bf16.msra.mxu0 %v1183
    %1831 = vmatprep.subr.bf16.mxu0 %v1188
    %1832 = vmatpush1.bf16.msra.mxu0 %v1187
    %1833 = vmatprep.mubr.bf16.mxu0 %v88
    %1834 = vmatmul.mubr.bf16.gmra.mrb[0].mxu0 %v87
    %v1835 = vpop.f32.mrb[0].mxu0
    %v1836 = vadd.f32 %v355, %v1835
    %v1837 = vpop.f32.mrb[0].mxu0
    %v1838 = vadd.f32 %v356, %v1837
    %v1839 = vpop.f32.mrb[0].mxu0
    %v1840 = vpop.f32.mrb[0].mxu0
    %1841 = vdwg.mxu0
    %1842 = vmatprep.subr.bf16.mxu0 %v1192
    %1843 = vmatpush1.bf16.msra.mxu0 %v1191
    %1844 = vmatprep.subr.bf16.mxu0 %v1196
    %1845 = vmatpush1.bf16.msra.mxu0 %v1195
    %1846 = vmatprep.subr.bf16.mxu0 %v1200
    %1847 = vmatpush1.bf16.msra.mxu0 %v1199
    %1848 = vmatprep.subr.bf16.mxu0 %v1204
    %1849 = vmatpush1.bf16.msra.mxu0 %v1203
    %1850 = vmatprep.subr.bf16.mxu0 %v1208
    %1851 = vmatpush1.bf16.msra.mxu0 %v1207
    %1852 = vmatprep.subr.bf16.mxu0 %v1212
    %1853 = vmatpush1.bf16.msra.mxu0 %v1211
    %1854 = vmatprep.subr.bf16.mxu0 %v1216
    %1855 = vmatpush1.bf16.msra.mxu0 %v1215
    %1856 = vmatprep.subr.bf16.mxu0 %v1220
    %1857 = vmatpush1.bf16.msra.mxu0 %v1219
    %1858 = vmatprep.subr.bf16.mxu0 %v1224
    %1859 = vmatpush1.bf16.msra.mxu0 %v1223
    %1860 = vmatprep.subr.bf16.mxu0 %v1228
    %1861 = vmatpush1.bf16.msra.mxu0 %v1227
    %1862 = vmatprep.subr.bf16.mxu0 %v1232
    %1863 = vmatpush1.bf16.msra.mxu0 %v1231
    %1864 = vmatprep.subr.bf16.mxu0 %v1236
    %1865 = vmatpush1.bf16.msra.mxu0 %v1235
    %1866 = vmatprep.subr.bf16.mxu0 %v1240
    %1867 = vmatpush1.bf16.msra.mxu0 %v1239
    %1868 = vmatprep.subr.bf16.mxu0 %v1244
    %1869 = vmatpush1.bf16.msra.mxu0 %v1243
    %1870 = vmatprep.subr.bf16.mxu0 %v1248
    %1871 = vmatpush1.bf16.msra.mxu0 %v1247
    %1872 = vmatprep.subr.bf16.mxu0 %v1252
    %1873 = vmatpush1.bf16.msra.mxu0 %v1251
    %1874 = vmatprep.mubr.bf16.mxu0 %v90
    %1875 = vmatmul.mubr.bf16.gmra.mrb[0].mxu0 %v89
    %v1876 = vpop.f32.mrb[0].mxu0
    %v1877 = vadd.f32 %v1836, %v1876
    %v1878 = vpop.f32.mrb[0].mxu0
    %v1879 = vadd.f32 %v1838, %v1878
    %v1880 = vpop.f32.mrb[0].mxu0
    %v1881 = vpop.f32.mrb[0].mxu0
    %1882 = vdwg.mxu0
    %1883 = vmatprep.subr.bf16.mxu0 %v1256
    %1884 = vmatpush1.bf16.msra.mxu0 %v1255
    %1885 = vmatprep.subr.bf16.mxu0 %v1260
    %1886 = vmatpush1.bf16.msra.mxu0 %v1259
    %1887 = vmatprep.subr.bf16.mxu0 %v1264
    %1888 = vmatpush1.bf16.msra.mxu0 %v1263
    %1889 = vmatprep.subr.bf16.mxu0 %v1268
    %1890 = vmatpush1.bf16.msra.mxu0 %v1267
    %1891 = vmatprep.subr.bf16.mxu0 %v1272
    %1892 = vmatpush1.bf16.msra.mxu0 %v1271
    %1893 = vmatprep.subr.bf16.mxu0 %v1276
    %1894 = vmatpush1.bf16.msra.mxu0 %v1275
    %1895 = vmatprep.subr.bf16.mxu0 %v1280
    %1896 = vmatpush1.bf16.msra.mxu0 %v1279
    %1897 = vmatprep.subr.bf16.mxu0 %v1284
    %1898 = vmatpush1.bf16.msra.mxu0 %v1283
    %1899 = vmatprep.subr.bf16.mxu0 %v1288
    %1900 = vmatpush1.bf16.msra.mxu0 %v1287
    %1901 = vmatprep.subr.bf16.mxu0 %v1292
    %1902 = vmatpush1.bf16.msra.mxu0 %v1291
    %1903 = vmatprep.subr.bf16.mxu0 %v1296
    %1904 = vmatpush1.bf16.msra.mxu0 %v1295
    %1905 = vmatprep.subr.bf16.mxu0 %v1300
    %1906 = vmatpush1.bf16.msra.mxu0 %v1299
    %1907 = vmatprep.subr.bf16.mxu0 %v1304
    %1908 = vmatpush1.bf16.msra.mxu0 %v1303
    %1909 = vmatprep.subr.bf16.mxu0 %v1308
    %1910 = vmatpush1.bf16.msra.mxu0 %v1307
    %1911 = vmatprep.subr.bf16.mxu0 %v1312
    %1912 = vmatpush1.bf16.msra.mxu0 %v1311
    %1913 = vmatprep.subr.bf16.mxu0 %v1316
    %1914 = vmatpush1.bf16.msra.mxu0 %v1315
    %1915 = vmatprep.mubr.bf16.mxu0 %v92
    %1916 = vmatmul.mubr.bf16.gmra.mrb[0].mxu0 %v91
    %v1917 = vpop.f32.mrb[0].mxu0
    %v1918 = vadd.f32 %v1877, %v1917
    %v1919 = vpop.f32.mrb[0].mxu0
    %v1920 = vadd.f32 %v1879, %v1919
    %v1921 = vpop.f32.mrb[0].mxu0
    %v1922 = vpop.f32.mrb[0].mxu0
    %1923 = vdwg.mxu0
    %1924 = vmatprep.subr.bf16.mxu0 %v1320
    %1925 = vmatpush1.bf16.msra.mxu0 %v1319
    %1926 = vmatprep.subr.bf16.mxu0 %v1324
    %1927 = vmatpush1.bf16.msra.mxu0 %v1323
    %1928 = vmatprep.subr.bf16.mxu0 %v1328
    %1929 = vmatpush1.bf16.msra.mxu0 %v1327
    %1930 = vmatprep.subr.bf16.mxu0 %v1332
    %1931 = vmatpush1.bf16.msra.mxu0 %v1331
    %1932 = vmatprep.subr.bf16.mxu0 %v1336
    %1933 = vmatpush1.bf16.msra.mxu0 %v1335
    %1934 = vmatprep.subr.bf16.mxu0 %v1340
    %1935 = vmatpush1.bf16.msra.mxu0 %v1339
    %1936 = vmatprep.subr.bf16.mxu0 %v1344
    %1937 = vmatpush1.bf16.msra.mxu0 %v1343
    %1938 = vmatprep.subr.bf16.mxu0 %v1348
    %1939 = vmatpush1.bf16.msra.mxu0 %v1347
    %1940 = vmatprep.subr.bf16.mxu0 %v1352
    %1941 = vmatpush1.bf16.msra.mxu0 %v1351
    %1942 = vmatprep.subr.bf16.mxu0 %v1356
    %1943 = vmatpush1.bf16.msra.mxu0 %v1355
    %1944 = vmatprep.subr.bf16.mxu0 %v1360
    %1945 = vmatpush1.bf16.msra.mxu0 %v1359
    %1946 = vmatprep.subr.bf16.mxu0 %v1364
    %1947 = vmatpush1.bf16.msra.mxu0 %v1363
    %1948 = vmatprep.subr.bf16.mxu0 %v1368
    %1949 = vmatpush1.bf16.msra.mxu0 %v1367
    %1950 = vmatprep.subr.bf16.mxu0 %v1372
    %1951 = vmatpush1.bf16.msra.mxu0 %v1371
    %1952 = vmatprep.subr.bf16.mxu0 %v1376
    %1953 = vmatpush1.bf16.msra.mxu0 %v1375
    %1954 = vmatprep.subr.bf16.mxu0 %v1380
    %1955 = vmatpush1.bf16.msra.mxu0 %v1379
    %1956 = vmatprep.mubr.bf16.mxu0 %v94
    %1957 = vmatmul.mubr.bf16.gmra.mrb[0].mxu0 %v93
    %v1958 = vpop.f32.mrb[0].mxu0
    %v1959 = vadd.f32 %v1918, %v1958
    %v1960 = vpop.f32.mrb[0].mxu0
    %v1961 = vadd.f32 %v1920, %v1960
    %v1962 = vpop.f32.mrb[0].mxu0
    %v1963 = vpop.f32.mrb[0].mxu0
    %1964 = vdwg.mxu0
    %vm1965 = vcmp.gt.f32.partialorder %v1795, 0.0
    %vm1966 = vcmp.gt.f32.partialorder %v1797, 0.0
    %vm1967 = vcmp.gt.f32.partialorder %v1959, 0.0
    %vm1968 = vcmp.gt.f32.partialorder %v1961, 0.0
    %v1969 = vmul.f32 %v1795, 0.2
    %v1970 = vmul.f32 %v1797, 0.2
    %v1971 = vmul.f32 %v1959, 0.2
    %v1972 = vmul.f32 %v1961, 0.2
    %v1973 = vsel %vm1965, %v1795, %v1969
    %v1974 = vsel %vm1966, %v1797, %v1970
    %v1975 = vsel %vm1967, %v1959, %v1971
    %v1976 = vsel %vm1968, %v1961, %v1972
    %v1977 = vpack.c.bf16 %v1973, %v1973
    %v1978 = vpack.c.bf16 %v1974, %v1974
    %v1979 = vpack.c.bf16 %v1975, %v1975
    %v1980 = vpack.c.bf16 %v1976, %v1976
    %v1981 = vld [vmem:[#allocation8] sm:$0xff]
    %v1982 = vld [vmem:[#allocation8 + $0x8] sm:$0xff]
    %v1983 = vld [vmem:[#allocation8 + $0x10] sm:$0xff]
    %v1984 = vld [vmem:[#allocation8 + $0x18] sm:$0xff]
    %v1985 = vld [vmem:[#allocation8 + $0x20] sm:$0xff]
    %v1986 = vld [vmem:[#allocation8 + $0x28] sm:$0xff]
    %v1987 = vld [vmem:[#allocation8 + $0x30] sm:$0xff]
    %v1988 = vld [vmem:[#allocation8 + $0x38] sm:$0xff]
    %v1989 = vld [vmem:[#allocation8 + $0x40] sm:$0xff]
    %v1990 = vld [vmem:[#allocation8 + $0x48] sm:$0xff]
    %v1991 = vld [vmem:[#allocation8 + $0x50] sm:$0xff]
    %v1992 = vld [vmem:[#allocation8 + $0x58] sm:$0xff]
    %v1993 = vld [vmem:[#allocation8 + $0x60] sm:$0xff]
    %v1994 = vld [vmem:[#allocation8 + $0x68] sm:$0xff]
    %v1995 = vld [vmem:[#allocation8 + $0x70] sm:$0xff]
    %v1996 = vld [vmem:[#allocation8 + $0x78] sm:$0xff]
    %v1997 = vld [vmem:[#allocation8 + $0x80] sm:$0xff]
    %v1998 = vld [vmem:[#allocation8 + $0x88] sm:$0xff]
    %v1999 = vld [vmem:[#allocation8 + $0x90] sm:$0xff]
    %v2000 = vld [vmem:[#allocation8 + $0x98] sm:$0xff]
    %v2001 = vld [vmem:[#allocation8 + $0xa0] sm:$0xff]
    %v2002 = vld [vmem:[#allocation8 + $0xa8] sm:$0xff]
    %v2003 = vld [vmem:[#allocation8 + $0xb0] sm:$0xff]
    %v2004 = vld [vmem:[#allocation8 + $0xb8] sm:$0xff]
    %v2005 = vld [vmem:[#allocation8 + $0xc0] sm:$0xff]
    %v2006 = vld [vmem:[#allocation8 + $0xc8] sm:$0xff]
    %v2007 = vld [vmem:[#allocation8 + $0xd0] sm:$0xff]
    %v2008 = vld [vmem:[#allocation8 + $0xd8] sm:$0xff]
    %v2009 = vld [vmem:[#allocation8 + $0xe0] sm:$0xff]
    %v2010 = vld [vmem:[#allocation8 + $0xe8] sm:$0xff]
    %v2011 = vld [vmem:[#allocation8 + $0xf0] sm:$0xff]
    %v2012 = vld [vmem:[#allocation8 + $0xf8] sm:$0xff]
    %v2013 = vld [vmem:[#allocation8 + $0x100] sm:$0xff]
    %v2014 = vld [vmem:[#allocation8 + $0x108] sm:$0xff]
    %v2015 = vld [vmem:[#allocation8 + $0x110] sm:$0xff]
    %v2016 = vld [vmem:[#allocation8 + $0x118] sm:$0xff]
    %v2017 = vld [vmem:[#allocation8 + $0x120] sm:$0xff]
    %v2018 = vld [vmem:[#allocation8 + $0x128] sm:$0xff]
    %v2019 = vld [vmem:[#allocation8 + $0x130] sm:$0xff]
    %v2020 = vld [vmem:[#allocation8 + $0x138] sm:$0xff]
    %v2021 = vld [vmem:[#allocation8 + $0x140] sm:$0xff]
    %v2022 = vld [vmem:[#allocation8 + $0x148] sm:$0xff]
    %v2023 = vld [vmem:[#allocation8 + $0x150] sm:$0xff]
    %v2024 = vld [vmem:[#allocation8 + $0x158] sm:$0xff]
    %v2025 = vld [vmem:[#allocation8 + $0x160] sm:$0xff]
    %v2026 = vld [vmem:[#allocation8 + $0x168] sm:$0xff]
    %v2027 = vld [vmem:[#allocation8 + $0x170] sm:$0xff]
    %v2028 = vld [vmem:[#allocation8 + $0x178] sm:$0xff]
    %v2029 = vld [vmem:[#allocation8 + $0x180] sm:$0xff]
    %v2030 = vld [vmem:[#allocation8 + $0x188] sm:$0xff]
    %v2031 = vld [vmem:[#allocation8 + $0x190] sm:$0xff]
    %v2032 = vld [vmem:[#allocation8 + $0x198] sm:$0xff]
    %v2033 = vld [vmem:[#allocation8 + $0x1a0] sm:$0xff]
    %v2034 = vld [vmem:[#allocation8 + $0x1a8] sm:$0xff]
    %v2035 = vld [vmem:[#allocation8 + $0x1b0] sm:$0xff]
    %v2036 = vld [vmem:[#allocation8 + $0x1b8] sm:$0xff]
    %v2037 = vld [vmem:[#allocation8 + $0x1c0] sm:$0xff]
    %v2038 = vld [vmem:[#allocation8 + $0x1c8] sm:$0xff]
    %v2039 = vld [vmem:[#allocation8 + $0x1d0] sm:$0xff]
    %v2040 = vld [vmem:[#allocation8 + $0x1d8] sm:$0xff]
    %v2041 = vld [vmem:[#allocation8 + $0x1e0] sm:$0xff]
    %v2042 = vld [vmem:[#allocation8 + $0x1e8] sm:$0xff]
    %v2043 = vld [vmem:[#allocation8 + $0x1f0] sm:$0xff]
    %v2044 = vld [vmem:[#allocation8 + $0x1f8] sm:$0xff]
    %v2045 = vld [vmem:[#allocation8 + $0x200] sm:$0xff]
    %v2046 = vld [vmem:[#allocation8 + $0x208] sm:$0xff]
    %v2047 = vld [vmem:[#allocation8 + $0x210] sm:$0xff]
    %v2048 = vld [vmem:[#allocation8 + $0x218] sm:$0xff]
    %v2049 = vld [vmem:[#allocation8 + $0x220] sm:$0xff]
    %v2050 = vld [vmem:[#allocation8 + $0x228] sm:$0xff]
    %v2051 = vld [vmem:[#allocation8 + $0x230] sm:$0xff]
    %v2052 = vld [vmem:[#allocation8 + $0x238] sm:$0xff]
    %v2053 = vld [vmem:[#allocation8 + $0x240] sm:$0xff]
    %v2054 = vld [vmem:[#allocation8 + $0x248] sm:$0xff]
    %v2055 = vld [vmem:[#allocation8 + $0x250] sm:$0xff]
    %v2056 = vld [vmem:[#allocation8 + $0x258] sm:$0xff]
    %v2057 = vld [vmem:[#allocation8 + $0x260] sm:$0xff]
    %v2058 = vld [vmem:[#allocation8 + $0x268] sm:$0xff]
    %v2059 = vld [vmem:[#allocation8 + $0x270] sm:$0xff]
    %v2060 = vld [vmem:[#allocation8 + $0x278] sm:$0xff]
    %v2061 = vld [vmem:[#allocation8 + $0x280] sm:$0xff]
    %v2062 = vld [vmem:[#allocation8 + $0x288] sm:$0xff]
    %v2063 = vld [vmem:[#allocation8 + $0x290] sm:$0xff]
    %v2064 = vld [vmem:[#allocation8 + $0x298] sm:$0xff]
    %v2065 = vld [vmem:[#allocation8 + $0x2a0] sm:$0xff]
    %v2066 = vld [vmem:[#allocation8 + $0x2a8] sm:$0xff]
    %v2067 = vld [vmem:[#allocation8 + $0x2b0] sm:$0xff]
    %v2068 = vld [vmem:[#allocation8 + $0x2b8] sm:$0xff]
    %v2069 = vld [vmem:[#allocation8 + $0x2c0] sm:$0xff]
    %v2070 = vld [vmem:[#allocation8 + $0x2c8] sm:$0xff]
    %v2071 = vld [vmem:[#allocation8 + $0x2d0] sm:$0xff]
    %v2072 = vld [vmem:[#allocation8 + $0x2d8] sm:$0xff]
    %v2073 = vld [vmem:[#allocation8 + $0x2e0] sm:$0xff]
    %v2074 = vld [vmem:[#allocation8 + $0x2e8] sm:$0xff]
    %v2075 = vld [vmem:[#allocation8 + $0x2f0] sm:$0xff]
    %v2076 = vld [vmem:[#allocation8 + $0x2f8] sm:$0xff]
    %v2077 = vld [vmem:[#allocation8 + $0x300] sm:$0xff]
    %v2078 = vld [vmem:[#allocation8 + $0x308] sm:$0xff]
    %v2079 = vld [vmem:[#allocation8 + $0x310] sm:$0xff]
    %v2080 = vld [vmem:[#allocation8 + $0x318] sm:$0xff]
    %v2081 = vld [vmem:[#allocation8 + $0x320] sm:$0xff]
    %v2082 = vld [vmem:[#allocation8 + $0x328] sm:$0xff]
    %v2083 = vld [vmem:[#allocation8 + $0x330] sm:$0xff]
    %v2084 = vld [vmem:[#allocation8 + $0x338] sm:$0xff]
    %v2085 = vld [vmem:[#allocation8 + $0x340] sm:$0xff]
    %v2086 = vld [vmem:[#allocation8 + $0x348] sm:$0xff]
    %v2087 = vld [vmem:[#allocation8 + $0x350] sm:$0xff]
    %v2088 = vld [vmem:[#allocation8 + $0x358] sm:$0xff]
    %v2089 = vld [vmem:[#allocation8 + $0x360] sm:$0xff]
    %v2090 = vld [vmem:[#allocation8 + $0x368] sm:$0xff]
    %v2091 = vld [vmem:[#allocation8 + $0x370] sm:$0xff]
    %v2092 = vld [vmem:[#allocation8 + $0x378] sm:$0xff]
    %v2093 = vld [vmem:[#allocation8 + $0x380] sm:$0xff]
    %v2094 = vld [vmem:[#allocation8 + $0x388] sm:$0xff]
    %v2095 = vld [vmem:[#allocation8 + $0x390] sm:$0xff]
    %v2096 = vld [vmem:[#allocation8 + $0x398] sm:$0xff]
    %v2097 = vld [vmem:[#allocation8 + $0x3a0] sm:$0xff]
    %v2098 = vld [vmem:[#allocation8 + $0x3a8] sm:$0xff]
    %v2099 = vld [vmem:[#allocation8 + $0x3b0] sm:$0xff]
    %v2100 = vld [vmem:[#allocation8 + $0x3b8] sm:$0xff]
    %v2101 = vld [vmem:[#allocation8 + $0x3c0] sm:$0xff]
    %v2102 = vld [vmem:[#allocation8 + $0x3c8] sm:$0xff]
    %v2103 = vld [vmem:[#allocation8 + $0x3d0] sm:$0xff]
    %v2104 = vld [vmem:[#allocation8 + $0x3d8] sm:$0xff]
    %v2105 = vld [vmem:[#allocation8 + $0x3e0] sm:$0xff]
    %v2106 = vld [vmem:[#allocation8 + $0x3e8] sm:$0xff]
    %v2107 = vld [vmem:[#allocation8 + $0x3f0] sm:$0xff]
    %v2108 = vld [vmem:[#allocation8 + $0x3f8] sm:$0xff]
    %v2109 = vld [vmem:[%s4] sm:$0xf]
    %v2111 = vlaneseq
    %v2112 = vshrl.u32 %v2111, 7
    %v2113 = vsub.s32 0, %v2112
    %v2114 = vrot.slane %v2109, %v2113
    %v2115 = vlaneseq
    %v2116 = vshrl.u32 %v2115, 7
    %v2117 = vsub.s32 1, %v2116
    %v2118 = vrot.slane %v2109, %v2117
    %v2119 = vlaneseq
    %v2120 = vshrl.u32 %v2119, 7
    %v2121 = vsub.s32 2, %v2120
    %v2122 = vrot.slane %v2109, %v2121
    %v2123 = vlaneseq
    %v2124 = vshrl.u32 %v2123, 7
    %v2125 = vsub.s32 3, %v2124
    %v2126 = vrot.slane %v2109, %v2125
    %v2259 = vunpack.c.l.b16 %v1981
    %v2260 = vunpack.c.h.b16 %v1981
    %v2261 = vunpack.c.l.b16 %v1982
    %v2262 = vunpack.c.h.b16 %v1982
    %v2263 = vunpack.c.l.b16 %v1983
    %v2264 = vunpack.c.h.b16 %v1983
    %v2265 = vunpack.c.l.b16 %v1984
    %v2266 = vunpack.c.h.b16 %v1984
    %v2267 = vunpack.c.l.b16 %v1985
    %v2268 = vunpack.c.h.b16 %v1985
    %v2269 = vunpack.c.l.b16 %v1986
    %v2270 = vunpack.c.h.b16 %v1986
    %v2271 = vunpack.c.l.b16 %v1987
    %v2272 = vunpack.c.h.b16 %v1987
    %v2273 = vunpack.c.l.b16 %v1988
    %v2274 = vunpack.c.h.b16 %v1988
    %v2275 = vunpack.c.l.b16 %v1989
    %v2276 = vunpack.c.h.b16 %v1989
    %v2277 = vunpack.c.l.b16 %v1990
    %v2278 = vunpack.c.h.b16 %v1990
    %v2279 = vunpack.c.l.b16 %v1991
    %v2280 = vunpack.c.h.b16 %v1991
    %v2281 = vunpack.c.l.b16 %v1992
    %v2282 = vunpack.c.h.b16 %v1992
    %v2283 = vunpack.c.l.b16 %v1993
    %v2284 = vunpack.c.h.b16 %v1993
    %v2285 = vunpack.c.l.b16 %v1994
    %v2286 = vunpack.c.h.b16 %v1994
    %v2287 = vunpack.c.l.b16 %v1995
    %v2288 = vunpack.c.h.b16 %v1995
    %v2289 = vunpack.c.l.b16 %v1996
    %v2290 = vunpack.c.h.b16 %v1996
    %v2291 = vunpack.c.l.b16 %v1997
    %v2292 = vunpack.c.h.b16 %v1997
    %v2293 = vunpack.c.l.b16 %v1998
    %v2294 = vunpack.c.h.b16 %v1998
    %v2295 = vunpack.c.l.b16 %v1999
    %v2296 = vunpack.c.h.b16 %v1999
    %v2297 = vunpack.c.l.b16 %v2000
    %v2298 = vunpack.c.h.b16 %v2000
    %v2299 = vunpack.c.l.b16 %v2001
    %v2300 = vunpack.c.h.b16 %v2001
    %v2301 = vunpack.c.l.b16 %v2002
    %v2302 = vunpack.c.h.b16 %v2002
    %v2303 = vunpack.c.l.b16 %v2003
    %v2304 = vunpack.c.h.b16 %v2003
    %v2305 = vunpack.c.l.b16 %v2004
    %v2306 = vunpack.c.h.b16 %v2004
    %v2307 = vunpack.c.l.b16 %v2005
    %v2308 = vunpack.c.h.b16 %v2005
    %v2309 = vunpack.c.l.b16 %v2006
    %v2310 = vunpack.c.h.b16 %v2006
    %v2311 = vunpack.c.l.b16 %v2007
    %v2312 = vunpack.c.h.b16 %v2007
    %v2313 = vunpack.c.l.b16 %v2008
    %v2314 = vunpack.c.h.b16 %v2008
    %v2315 = vunpack.c.l.b16 %v2009
    %v2316 = vunpack.c.h.b16 %v2009
    %v2317 = vunpack.c.l.b16 %v2010
    %v2318 = vunpack.c.h.b16 %v2010
    %v2319 = vunpack.c.l.b16 %v2011
    %v2320 = vunpack.c.h.b16 %v2011
    %v2321 = vunpack.c.l.b16 %v2012
    %v2322 = vunpack.c.h.b16 %v2012
    %v2323 = vunpack.c.l.b16 %v2013
    %v2324 = vunpack.c.h.b16 %v2013
    %v2325 = vunpack.c.l.b16 %v2014
    %v2326 = vunpack.c.h.b16 %v2014
    %v2327 = vunpack.c.l.b16 %v2015
    %v2328 = vunpack.c.h.b16 %v2015
    %v2329 = vunpack.c.l.b16 %v2016
    %v2330 = vunpack.c.h.b16 %v2016
    %v2331 = vunpack.c.l.b16 %v2017
    %v2332 = vunpack.c.h.b16 %v2017
    %v2333 = vunpack.c.l.b16 %v2018
    %v2334 = vunpack.c.h.b16 %v2018
    %v2335 = vunpack.c.l.b16 %v2019
    %v2336 = vunpack.c.h.b16 %v2019
    %v2337 = vunpack.c.l.b16 %v2020
    %v2338 = vunpack.c.h.b16 %v2020
    %v2339 = vunpack.c.l.b16 %v2021
    %v2340 = vunpack.c.h.b16 %v2021
    %v2341 = vunpack.c.l.b16 %v2022
    %v2342 = vunpack.c.h.b16 %v2022
    %v2343 = vunpack.c.l.b16 %v2023
    %v2344 = vunpack.c.h.b16 %v2023
    %v2345 = vunpack.c.l.b16 %v2024
    %v2346 = vunpack.c.h.b16 %v2024
    %v2347 = vunpack.c.l.b16 %v2025
    %v2348 = vunpack.c.h.b16 %v2025
    %v2349 = vunpack.c.l.b16 %v2026
    %v2350 = vunpack.c.h.b16 %v2026
    %v2351 = vunpack.c.l.b16 %v2027
    %v2352 = vunpack.c.h.b16 %v2027
    %v2353 = vunpack.c.l.b16 %v2028
    %v2354 = vunpack.c.h.b16 %v2028
    %v2355 = vunpack.c.l.b16 %v2029
    %v2356 = vunpack.c.h.b16 %v2029
    %v2357 = vunpack.c.l.b16 %v2030
    %v2358 = vunpack.c.h.b16 %v2030
    %v2359 = vunpack.c.l.b16 %v2031
    %v2360 = vunpack.c.h.b16 %v2031
    %v2361 = vunpack.c.l.b16 %v2032
    %v2362 = vunpack.c.h.b16 %v2032
    %v2363 = vunpack.c.l.b16 %v2033
    %v2364 = vunpack.c.h.b16 %v2033
    %v2365 = vunpack.c.l.b16 %v2034
    %v2366 = vunpack.c.h.b16 %v2034
    %v2367 = vunpack.c.l.b16 %v2035
    %v2368 = vunpack.c.h.b16 %v2035
    %v2369 = vunpack.c.l.b16 %v2036
    %v2370 = vunpack.c.h.b16 %v2036
    %v2371 = vunpack.c.l.b16 %v2037
    %v2372 = vunpack.c.h.b16 %v2037
    %v2373 = vunpack.c.l.b16 %v2038
    %v2374 = vunpack.c.h.b16 %v2038
    %v2375 = vunpack.c.l.b16 %v2039
    %v2376 = vunpack.c.h.b16 %v2039
    %v2377 = vunpack.c.l.b16 %v2040
    %v2378 = vunpack.c.h.b16 %v2040
    %v2379 = vunpack.c.l.b16 %v2041
    %v2380 = vunpack.c.h.b16 %v2041
    %v2381 = vunpack.c.l.b16 %v2042
    %v2382 = vunpack.c.h.b16 %v2042
    %v2383 = vunpack.c.l.b16 %v2043
    %v2384 = vunpack.c.h.b16 %v2043
    %v2385 = vunpack.c.l.b16 %v2044
    %v2386 = vunpack.c.h.b16 %v2044
    %v2387 = vunpack.c.l.b16 %v2045
    %v2388 = vunpack.c.h.b16 %v2045
    %v2389 = vunpack.c.l.b16 %v2046
    %v2390 = vunpack.c.h.b16 %v2046
    %v2391 = vunpack.c.l.b16 %v2047
    %v2392 = vunpack.c.h.b16 %v2047
    %v2393 = vunpack.c.l.b16 %v2048
    %v2394 = vunpack.c.h.b16 %v2048
    %v2395 = vunpack.c.l.b16 %v2049
    %v2396 = vunpack.c.h.b16 %v2049
    %v2397 = vunpack.c.l.b16 %v2050
    %v2398 = vunpack.c.h.b16 %v2050
    %v2399 = vunpack.c.l.b16 %v2051
    %v2400 = vunpack.c.h.b16 %v2051
    %v2401 = vunpack.c.l.b16 %v2052
    %v2402 = vunpack.c.h.b16 %v2052
    %v2403 = vunpack.c.l.b16 %v2053
    %v2404 = vunpack.c.h.b16 %v2053
    %v2405 = vunpack.c.l.b16 %v2054
    %v2406 = vunpack.c.h.b16 %v2054
    %v2407 = vunpack.c.l.b16 %v2055
    %v2408 = vunpack.c.h.b16 %v2055
    %v2409 = vunpack.c.l.b16 %v2056
    %v2410 = vunpack.c.h.b16 %v2056
    %v2411 = vunpack.c.l.b16 %v2057
    %v2412 = vunpack.c.h.b16 %v2057
    %v2413 = vunpack.c.l.b16 %v2058
    %v2414 = vunpack.c.h.b16 %v2058
    %v2415 = vunpack.c.l.b16 %v2059
    %v2416 = vunpack.c.h.b16 %v2059
    %v2417 = vunpack.c.l.b16 %v2060
    %v2418 = vunpack.c.h.b16 %v2060
    %v2419 = vunpack.c.l.b16 %v2061
    %v2420 = vunpack.c.h.b16 %v2061
    %v2421 = vunpack.c.l.b16 %v2062
    %v2422 = vunpack.c.h.b16 %v2062
    %v2423 = vunpack.c.l.b16 %v2063
    %v2424 = vunpack.c.h.b16 %v2063
    %v2425 = vunpack.c.l.b16 %v2064
    %v2426 = vunpack.c.h.b16 %v2064
    %v2427 = vunpack.c.l.b16 %v2065
    %v2428 = vunpack.c.h.b16 %v2065
    %v2429 = vunpack.c.l.b16 %v2066
    %v2430 = vunpack.c.h.b16 %v2066
    %v2431 = vunpack.c.l.b16 %v2067
    %v2432 = vunpack.c.h.b16 %v2067
    %v2433 = vunpack.c.l.b16 %v2068
    %v2434 = vunpack.c.h.b16 %v2068
    %v2435 = vunpack.c.l.b16 %v2069
    %v2436 = vunpack.c.h.b16 %v2069
    %v2437 = vunpack.c.l.b16 %v2070
    %v2438 = vunpack.c.h.b16 %v2070
    %v2439 = vunpack.c.l.b16 %v2071
    %v2440 = vunpack.c.h.b16 %v2071
    %v2441 = vunpack.c.l.b16 %v2072
    %v2442 = vunpack.c.h.b16 %v2072
    %v2443 = vunpack.c.l.b16 %v2073
    %v2444 = vunpack.c.h.b16 %v2073
    %v2445 = vunpack.c.l.b16 %v2074
    %v2446 = vunpack.c.h.b16 %v2074
    %v2447 = vunpack.c.l.b16 %v2075
    %v2448 = vunpack.c.h.b16 %v2075
    %v2449 = vunpack.c.l.b16 %v2076
    %v2450 = vunpack.c.h.b16 %v2076
    %v2451 = vunpack.c.l.b16 %v2077
    %v2452 = vunpack.c.h.b16 %v2077
    %v2453 = vunpack.c.l.b16 %v2078
    %v2454 = vunpack.c.h.b16 %v2078
    %v2455 = vunpack.c.l.b16 %v2079
    %v2456 = vunpack.c.h.b16 %v2079
    %v2457 = vunpack.c.l.b16 %v2080
    %v2458 = vunpack.c.h.b16 %v2080
    %v2459 = vunpack.c.l.b16 %v2081
    %v2460 = vunpack.c.h.b16 %v2081
    %v2461 = vunpack.c.l.b16 %v2082
    %v2462 = vunpack.c.h.b16 %v2082
    %v2463 = vunpack.c.l.b16 %v2083
    %v2464 = vunpack.c.h.b16 %v2083
    %v2465 = vunpack.c.l.b16 %v2084
    %v2466 = vunpack.c.h.b16 %v2084
    %v2467 = vunpack.c.l.b16 %v2085
    %v2468 = vunpack.c.h.b16 %v2085
    %v2469 = vunpack.c.l.b16 %v2086
    %v2470 = vunpack.c.h.b16 %v2086
    %v2471 = vunpack.c.l.b16 %v2087
    %v2472 = vunpack.c.h.b16 %v2087
    %v2473 = vunpack.c.l.b16 %v2088
    %v2474 = vunpack.c.h.b16 %v2088
    %v2475 = vunpack.c.l.b16 %v2089
    %v2476 = vunpack.c.h.b16 %v2089
    %v2477 = vunpack.c.l.b16 %v2090
    %v2478 = vunpack.c.h.b16 %v2090
    %v2479 = vunpack.c.l.b16 %v2091
    %v2480 = vunpack.c.h.b16 %v2091
    %v2481 = vunpack.c.l.b16 %v2092
    %v2482 = vunpack.c.h.b16 %v2092
    %v2483 = vunpack.c.l.b16 %v2093
    %v2484 = vunpack.c.h.b16 %v2093
    %v2485 = vunpack.c.l.b16 %v2094
    %v2486 = vunpack.c.h.b16 %v2094
    %v2487 = vunpack.c.l.b16 %v2095
    %v2488 = vunpack.c.h.b16 %v2095
    %v2489 = vunpack.c.l.b16 %v2096
    %v2490 = vunpack.c.h.b16 %v2096
    %v2491 = vunpack.c.l.b16 %v2097
    %v2492 = vunpack.c.h.b16 %v2097
    %v2493 = vunpack.c.l.b16 %v2098
    %v2494 = vunpack.c.h.b16 %v2098
    %v2495 = vunpack.c.l.b16 %v2099
    %v2496 = vunpack.c.h.b16 %v2099
    %v2497 = vunpack.c.l.b16 %v2100
    %v2498 = vunpack.c.h.b16 %v2100
    %v2499 = vunpack.c.l.b16 %v2101
    %v2500 = vunpack.c.h.b16 %v2101
    %v2501 = vunpack.c.l.b16 %v2102
    %v2502 = vunpack.c.h.b16 %v2102
    %v2503 = vunpack.c.l.b16 %v2103
    %v2504 = vunpack.c.h.b16 %v2103
    %v2505 = vunpack.c.l.b16 %v2104
    %v2506 = vunpack.c.h.b16 %v2104
    %v2507 = vunpack.c.l.b16 %v2105
    %v2508 = vunpack.c.h.b16 %v2105
    %v2509 = vunpack.c.l.b16 %v2106
    %v2510 = vunpack.c.h.b16 %v2106
    %v2511 = vunpack.c.l.b16 %v2107
    %v2512 = vunpack.c.h.b16 %v2107
    %v2513 = vunpack.c.l.b16 %v2108
    %v2514 = vunpack.c.h.b16 %v2108
    %v2515 = vpack.c.b16 %v2263, %v2259
    %v2516 = vpack.c.b16 %v2264, %v2260
    %v2517 = vpack.c.b16 %v2265, %v2261
    %v2518 = vpack.c.b16 %v2266, %v2262
    %v2519 = vpack.c.b16 %v2271, %v2267
    %v2520 = vpack.c.b16 %v2272, %v2268
    %v2521 = vpack.c.b16 %v2273, %v2269
    %v2522 = vpack.c.b16 %v2274, %v2270
    %v2523 = vpack.c.b16 %v2279, %v2275
    %v2524 = vpack.c.b16 %v2280, %v2276
    %v2525 = vpack.c.b16 %v2281, %v2277
    %v2526 = vpack.c.b16 %v2282, %v2278
    %v2527 = vpack.c.b16 %v2287, %v2283
    %v2528 = vpack.c.b16 %v2288, %v2284
    %v2529 = vpack.c.b16 %v2289, %v2285
    %v2530 = vpack.c.b16 %v2290, %v2286
    %v2531 = vpack.c.b16 %v2295, %v2291
    %v2532 = vpack.c.b16 %v2296, %v2292
    %v2533 = vpack.c.b16 %v2297, %v2293
    %v2534 = vpack.c.b16 %v2298, %v2294
    %v2535 = vpack.c.b16 %v2303, %v2299
    %v2536 = vpack.c.b16 %v2304, %v2300
    %v2537 = vpack.c.b16 %v2305, %v2301
    %v2538 = vpack.c.b16 %v2306, %v2302
    %v2539 = vpack.c.b16 %v2311, %v2307
    %v2540 = vpack.c.b16 %v2312, %v2308
    %v2541 = vpack.c.b16 %v2313, %v2309
    %v2542 = vpack.c.b16 %v2314, %v2310
    %v2543 = vpack.c.b16 %v2319, %v2315
    %v2544 = vpack.c.b16 %v2320, %v2316
    %v2545 = vpack.c.b16 %v2321, %v2317
    %v2546 = vpack.c.b16 %v2322, %v2318
    %v2547 = vpack.c.b16 %v2327, %v2323
    %v2548 = vpack.c.b16 %v2328, %v2324
    %v2549 = vpack.c.b16 %v2329, %v2325
    %v2550 = vpack.c.b16 %v2330, %v2326
    %v2551 = vpack.c.b16 %v2335, %v2331
    %v2552 = vpack.c.b16 %v2336, %v2332
    %v2553 = vpack.c.b16 %v2337, %v2333
    %v2554 = vpack.c.b16 %v2338, %v2334
    %v2555 = vpack.c.b16 %v2343, %v2339
    %v2556 = vpack.c.b16 %v2344, %v2340
    %v2557 = vpack.c.b16 %v2345, %v2341
    %v2558 = vpack.c.b16 %v2346, %v2342
    %v2559 = vpack.c.b16 %v2351, %v2347
    %v2560 = vpack.c.b16 %v2352, %v2348
    %v2561 = vpack.c.b16 %v2353, %v2349
    %v2562 = vpack.c.b16 %v2354, %v2350
    %v2563 = vpack.c.b16 %v2359, %v2355
    %v2564 = vpack.c.b16 %v2360, %v2356
    %v2565 = vpack.c.b16 %v2361, %v2357
    %v2566 = vpack.c.b16 %v2362, %v2358
    %v2567 = vpack.c.b16 %v2367, %v2363
    %v2568 = vpack.c.b16 %v2368, %v2364
    %v2569 = vpack.c.b16 %v2369, %v2365
    %v2570 = vpack.c.b16 %v2370, %v2366
    %v2571 = vpack.c.b16 %v2375, %v2371
    %v2572 = vpack.c.b16 %v2376, %v2372
    %v2573 = vpack.c.b16 %v2377, %v2373
    %v2574 = vpack.c.b16 %v2378, %v2374
    %v2575 = vpack.c.b16 %v2383, %v2379
    %v2576 = vpack.c.b16 %v2384, %v2380
    %v2577 = vpack.c.b16 %v2385, %v2381
    %v2578 = vpack.c.b16 %v2386, %v2382
    %v2579 = vpack.c.b16 %v2391, %v2387
    %v2580 = vpack.c.b16 %v2392, %v2388
    %v2581 = vpack.c.b16 %v2393, %v2389
    %v2582 = vpack.c.b16 %v2394, %v2390
    %v2583 = vpack.c.b16 %v2399, %v2395
    %v2584 = vpack.c.b16 %v2400, %v2396
    %v2585 = vpack.c.b16 %v2401, %v2397
    %v2586 = vpack.c.b16 %v2402, %v2398
    %v2587 = vpack.c.b16 %v2407, %v2403
    %v2588 = vpack.c.b16 %v2408, %v2404
    %v2589 = vpack.c.b16 %v2409, %v2405
    %v2590 = vpack.c.b16 %v2410, %v2406
    %v2591 = vpack.c.b16 %v2415, %v2411
    %v2592 = vpack.c.b16 %v2416, %v2412
    %v2593 = vpack.c.b16 %v2417, %v2413
    %v2594 = vpack.c.b16 %v2418, %v2414
    %v2595 = vpack.c.b16 %v2423, %v2419
    %v2596 = vpack.c.b16 %v2424, %v2420
    %v2597 = vpack.c.b16 %v2425, %v2421
    %v2598 = vpack.c.b16 %v2426, %v2422
    %v2599 = vpack.c.b16 %v2431, %v2427
    %v2600 = vpack.c.b16 %v2432, %v2428
    %v2601 = vpack.c.b16 %v2433, %v2429
    %v2602 = vpack.c.b16 %v2434, %v2430
    %v2603 = vpack.c.b16 %v2439, %v2435
    %v2604 = vpack.c.b16 %v2440, %v2436
    %v2605 = vpack.c.b16 %v2441, %v2437
    %v2606 = vpack.c.b16 %v2442, %v2438
    %v2607 = vpack.c.b16 %v2447, %v2443
    %v2608 = vpack.c.b16 %v2448, %v2444
    %v2609 = vpack.c.b16 %v2449, %v2445
    %v2610 = vpack.c.b16 %v2450, %v2446
    %v2611 = vpack.c.b16 %v2455, %v2451
    %v2612 = vpack.c.b16 %v2456, %v2452
    %v2613 = vpack.c.b16 %v2457, %v2453
    %v2614 = vpack.c.b16 %v2458, %v2454
    %v2615 = vpack.c.b16 %v2463, %v2459
    %v2616 = vpack.c.b16 %v2464, %v2460
    %v2617 = vpack.c.b16 %v2465, %v2461
    %v2618 = vpack.c.b16 %v2466, %v2462
    %v2619 = vpack.c.b16 %v2471, %v2467
    %v2620 = vpack.c.b16 %v2472, %v2468
    %v2621 = vpack.c.b16 %v2473, %v2469
    %v2622 = vpack.c.b16 %v2474, %v2470
    %v2623 = vpack.c.b16 %v2479, %v2475
    %v2624 = vpack.c.b16 %v2480, %v2476
    %v2625 = vpack.c.b16 %v2481, %v2477
    %v2626 = vpack.c.b16 %v2482, %v2478
    %v2627 = vpack.c.b16 %v2487, %v2483
    %v2628 = vpack.c.b16 %v2488, %v2484
    %v2629 = vpack.c.b16 %v2489, %v2485
    %v2630 = vpack.c.b16 %v2490, %v2486
    %v2631 = vpack.c.b16 %v2495, %v2491
    %v2632 = vpack.c.b16 %v2496, %v2492
    %v2633 = vpack.c.b16 %v2497, %v2493
    %v2634 = vpack.c.b16 %v2498, %v2494
    %v2635 = vpack.c.b16 %v2503, %v2499
    %v2636 = vpack.c.b16 %v2504, %v2500
    %v2637 = vpack.c.b16 %v2505, %v2501
    %v2638 = vpack.c.b16 %v2506, %v2502
    %v2639 = vpack.c.b16 %v2511, %v2507
    %v2640 = vpack.c.b16 %v2512, %v2508
    %v2641 = vpack.c.b16 %v2513, %v2509
    %v2642 = vpack.c.b16 %v2514, %v2510
    %2771 = vmatprep.subr.bf16.mxu0 %v2516
    %2772 = vmatpush1.bf16.msra.mxu0 %v2515
    %2773 = vmatprep.subr.bf16.mxu0 %v2520
    %2774 = vmatpush1.bf16.msra.mxu0 %v2519
    %2775 = vmatprep.subr.bf16.mxu0 %v2524
    %2776 = vmatpush1.bf16.msra.mxu0 %v2523
    %2777 = vmatprep.subr.bf16.mxu0 %v2528
    %2778 = vmatpush1.bf16.msra.mxu0 %v2527
    %2779 = vmatprep.subr.bf16.mxu0 %v2532
    %2780 = vmatpush1.bf16.msra.mxu0 %v2531
    %2781 = vmatprep.subr.bf16.mxu0 %v2536
    %2782 = vmatpush1.bf16.msra.mxu0 %v2535
    %2783 = vmatprep.subr.bf16.mxu0 %v2540
    %2784 = vmatpush1.bf16.msra.mxu0 %v2539
    %2785 = vmatprep.subr.bf16.mxu0 %v2544
    %2786 = vmatpush1.bf16.msra.mxu0 %v2543
    %2787 = vmatprep.subr.bf16.mxu0 %v2548
    %2788 = vmatpush1.bf16.msra.mxu0 %v2547
    %2789 = vmatprep.subr.bf16.mxu0 %v2552
    %2790 = vmatpush1.bf16.msra.mxu0 %v2551
    %2791 = vmatprep.subr.bf16.mxu0 %v2556
    %2792 = vmatpush1.bf16.msra.mxu0 %v2555
    %2793 = vmatprep.subr.bf16.mxu0 %v2560
    %2794 = vmatpush1.bf16.msra.mxu0 %v2559
    %2795 = vmatprep.subr.bf16.mxu0 %v2564
    %2796 = vmatpush1.bf16.msra.mxu0 %v2563
    %2797 = vmatprep.subr.bf16.mxu0 %v2568
    %2798 = vmatpush1.bf16.msra.mxu0 %v2567
    %2799 = vmatprep.subr.bf16.mxu0 %v2572
    %2800 = vmatpush1.bf16.msra.mxu0 %v2571
    %2801 = vmatprep.subr.bf16.mxu0 %v2576
    %2802 = vmatpush1.bf16.msra.mxu0 %v2575
    %2803 = vmatprep.mubr.bf16.mxu0 %v1978
    %2804 = vmatmul.mubr.bf16.gmra.mrb[0].mxu0 %v1977
    %v2805 = vpop.f32.mrb[0].mxu0
    %v2806 = vadd.f32 %v2114, %v2805
    %v2807 = vpop.f32.mrb[0].mxu0
    %v2808 = vadd.f32 %v2118, %v2807
    %v2809 = vpop.f32.mrb[0].mxu0
    %v2810 = vpop.f32.mrb[0].mxu0
    %2811 = vdwg.mxu0
    %2812 = vmatprep.subr.bf16.mxu0 %v2580
    %2813 = vmatpush1.bf16.msra.mxu0 %v2579
    %2814 = vmatprep.subr.bf16.mxu0 %v2584
    %2815 = vmatpush1.bf16.msra.mxu0 %v2583
    %2816 = vmatprep.subr.bf16.mxu0 %v2588
    %2817 = vmatpush1.bf16.msra.mxu0 %v2587
    %2818 = vmatprep.subr.bf16.mxu0 %v2592
    %2819 = vmatpush1.bf16.msra.mxu0 %v2591
    %2820 = vmatprep.subr.bf16.mxu0 %v2596
    %2821 = vmatpush1.bf16.msra.mxu0 %v2595
    %2822 = vmatprep.subr.bf16.mxu0 %v2600
    %2823 = vmatpush1.bf16.msra.mxu0 %v2599
    %2824 = vmatprep.subr.bf16.mxu0 %v2604
    %2825 = vmatpush1.bf16.msra.mxu0 %v2603
    %2826 = vmatprep.subr.bf16.mxu0 %v2608
    %2827 = vmatpush1.bf16.msra.mxu0 %v2607
    %2828 = vmatprep.subr.bf16.mxu0 %v2612
    %2829 = vmatpush1.bf16.msra.mxu0 %v2611
    %2830 = vmatprep.subr.bf16.mxu0 %v2616
    %2831 = vmatpush1.bf16.msra.mxu0 %v2615
    %2832 = vmatprep.subr.bf16.mxu0 %v2620
    %2833 = vmatpush1.bf16.msra.mxu0 %v2619
    %2834 = vmatprep.subr.bf16.mxu0 %v2624
    %2835 = vmatpush1.bf16.msra.mxu0 %v2623
    %2836 = vmatprep.subr.bf16.mxu0 %v2628
    %2837 = vmatpush1.bf16.msra.mxu0 %v2627
    %2838 = vmatprep.subr.bf16.mxu0 %v2632
    %2839 = vmatpush1.bf16.msra.mxu0 %v2631
    %2840 = vmatprep.subr.bf16.mxu0 %v2636
    %2841 = vmatpush1.bf16.msra.mxu0 %v2635
    %2842 = vmatprep.subr.bf16.mxu0 %v2640
    %2843 = vmatpush1.bf16.msra.mxu0 %v2639
    %2844 = vmatprep.mubr.bf16.mxu0 %v1980
    %2845 = vmatmul.mubr.bf16.gmra.mrb[0].mxu0 %v1979
    %v2846 = vpop.f32.mrb[0].mxu0
    %v2847 = vadd.f32 %v2806, %v2846
    %v2848 = vpop.f32.mrb[0].mxu0
    %v2849 = vadd.f32 %v2808, %v2848
    %v2850 = vpop.f32.mrb[0].mxu0
    %v2851 = vpop.f32.mrb[0].mxu0
    %2852 = vdwg.mxu0
    %2853 = vmatprep.subr.bf16.mxu0 %v2518
    %2854 = vmatpush1.bf16.msra.mxu0 %v2517
    %2855 = vmatprep.subr.bf16.mxu0 %v2522
    %2856 = vmatpush1.bf16.msra.mxu0 %v2521
    %2857 = vmatprep.subr.bf16.mxu0 %v2526
    %2858 = vmatpush1.bf16.msra.mxu0 %v2525
    %2859 = vmatprep.subr.bf16.mxu0 %v2530
    %2860 = vmatpush1.bf16.msra.mxu0 %v2529
    %2861 = vmatprep.subr.bf16.mxu0 %v2534
    %2862 = vmatpush1.bf16.msra.mxu0 %v2533
    %2863 = vmatprep.subr.bf16.mxu0 %v2538
    %2864 = vmatpush1.bf16.msra.mxu0 %v2537
    %2865 = vmatprep.subr.bf16.mxu0 %v2542
    %2866 = vmatpush1.bf16.msra.mxu0 %v2541
    %2867 = vmatprep.subr.bf16.mxu0 %v2546
    %2868 = vmatpush1.bf16.msra.mxu0 %v2545
    %2869 = vmatprep.subr.bf16.mxu0 %v2550
    %2870 = vmatpush1.bf16.msra.mxu0 %v2549
    %2871 = vmatprep.subr.bf16.mxu0 %v2554
    %2872 = vmatpush1.bf16.msra.mxu0 %v2553
    %2873 = vmatprep.subr.bf16.mxu0 %v2558
    %2874 = vmatpush1.bf16.msra.mxu0 %v2557
    %2875 = vmatprep.subr.bf16.mxu0 %v2562
    %2876 = vmatpush1.bf16.msra.mxu0 %v2561
    %2877 = vmatprep.subr.bf16.mxu0 %v2566
    %2878 = vmatpush1.bf16.msra.mxu0 %v2565
    %2879 = vmatprep.subr.bf16.mxu0 %v2570
    %2880 = vmatpush1.bf16.msra.mxu0 %v2569
    %2881 = vmatprep.subr.bf16.mxu0 %v2574
    %2882 = vmatpush1.bf16.msra.mxu0 %v2573
    %2883 = vmatprep.subr.bf16.mxu0 %v2578
    %2884 = vmatpush1.bf16.msra.mxu0 %v2577
    %2885 = vmatprep.mubr.bf16.mxu0 %v1978
    %2886 = vmatmul.mubr.bf16.gmra.mrb[0].mxu0 %v1977
    %v2887 = vpop.f32.mrb[0].mxu0
    %v2888 = vadd.f32 %v2122, %v2887
    %v2889 = vpop.f32.mrb[0].mxu0
    %v2890 = vadd.f32 %v2126, %v2889
    %v2891 = vpop.f32.mrb[0].mxu0
    %v2892 = vpop.f32.mrb[0].mxu0
    %2893 = vdwg.mxu0
    %2894 = vmatprep.subr.bf16.mxu0 %v2582
    %2895 = vmatpush1.bf16.msra.mxu0 %v2581
    %2896 = vmatprep.subr.bf16.mxu0 %v2586
    %2897 = vmatpush1.bf16.msra.mxu0 %v2585
    %2898 = vmatprep.subr.bf16.mxu0 %v2590
    %2899 = vmatpush1.bf16.msra.mxu0 %v2589
    %2900 = vmatprep.subr.bf16.mxu0 %v2594
    %2901 = vmatpush1.bf16.msra.mxu0 %v2593
    %2902 = vmatprep.subr.bf16.mxu0 %v2598
    %2903 = vmatpush1.bf16.msra.mxu0 %v2597
    %2904 = vmatprep.subr.bf16.mxu0 %v2602
    %2905 = vmatpush1.bf16.msra.mxu0 %v2601
    %2906 = vmatprep.subr.bf16.mxu0 %v2606
    %2907 = vmatpush1.bf16.msra.mxu0 %v2605
    %2908 = vmatprep.subr.bf16.mxu0 %v2610
    %2909 = vmatpush1.bf16.msra.mxu0 %v2609
    %2910 = vmatprep.subr.bf16.mxu0 %v2614
    %2911 = vmatpush1.bf16.msra.mxu0 %v2613
    %2912 = vmatprep.subr.bf16.mxu0 %v2618
    %2913 = vmatpush1.bf16.msra.mxu0 %v2617
    %2914 = vmatprep.subr.bf16.mxu0 %v2622
    %2915 = vmatpush1.bf16.msra.mxu0 %v2621
    %2916 = vmatprep.subr.bf16.mxu0 %v2626
    %2917 = vmatpush1.bf16.msra.mxu0 %v2625
    %2918 = vmatprep.subr.bf16.mxu0 %v2630
    %2919 = vmatpush1.bf16.msra.mxu0 %v2629
    %2920 = vmatprep.subr.bf16.mxu0 %v2634
    %2921 = vmatpush1.bf16.msra.mxu0 %v2633
    %2922 = vmatprep.subr.bf16.mxu0 %v2638
    %2923 = vmatpush1.bf16.msra.mxu0 %v2637
    %2924 = vmatprep.subr.bf16.mxu0 %v2642
    %2925 = vmatpush1.bf16.msra.mxu0 %v2641
    %2926 = vmatprep.mubr.bf16.mxu0 %v1980
    %2927 = vmatmul.mubr.bf16.gmra.mrb[0].mxu0 %v1979
    %v2928 = vpop.f32.mrb[0].mxu0
    %v2929 = vadd.f32 %v2888, %v2928
    %v2930 = vpop.f32.mrb[0].mxu0
    %v2931 = vadd.f32 %v2890, %v2930
    %v2932 = vpop.f32.mrb[0].mxu0
    %v2933 = vpop.f32.mrb[0].mxu0
    %2934 = vdwg.mxu0
    %vm2935 = vcmp.gt.f32.partialorder %v2847, 0.0
    %vm2936 = vcmp.gt.f32.partialorder %v2849, 0.0
    %vm2937 = vcmp.gt.f32.partialorder %v2929, 0.0
    %vm2938 = vcmp.gt.f32.partialorder %v2931, 0.0
    %v2939 = vmul.f32 %v2847, 0.2
    %v2940 = vmul.f32 %v2849, 0.2
    %v2941 = vmul.f32 %v2929, 0.2
    %v2942 = vmul.f32 %v2931, 0.2
    %v2943 = vsel %vm2935, %v2847, %v2939
    %v2944 = vsel %vm2936, %v2849, %v2940
    %v2945 = vsel %vm2937, %v2929, %v2941
    %v2946 = vsel %vm2938, %v2931, %v2942
    %v2947 = vld [vmem:[%s5] sm:$0xf]
    %v2949 = vlaneseq
    %v2950 = vshrl.u32 %v2949, 7
    %v2951 = vsub.s32 0, %v2950
    %v2952 = vrot.slane %v2947, %v2951
    %v2953 = vlaneseq
    %v2954 = vshrl.u32 %v2953, 7
    %v2955 = vsub.s32 1, %v2954
    %v2956 = vrot.slane %v2947, %v2955
    %v2957 = vlaneseq
    %v2958 = vshrl.u32 %v2957, 7
    %v2959 = vsub.s32 2, %v2958
    %v2960 = vrot.slane %v2947, %v2959
    %v2961 = vlaneseq
    %v2962 = vshrl.u32 %v2961, 7
    %v2963 = vsub.s32 3, %v2962
    %v2964 = vrot.slane %v2947, %v2963
    %v2969 = vmul.f32 %v2943, %v2952
    %v2970 = vmul.f32 %v2944, %v2956
    %v2971 = vmul.f32 %v2945, %v2960
    %v2972 = vmul.f32 %v2946, %v2964
    %v2973 = vadd.f32 %v2969, %v2970
    %v2974 = vadd.f32 %v2973, %v2971
    %v2975 = vadd.f32 %v2974, %v2972
    %2976 = vadd.xlane.f32.xlu0 %v2975
    %v2977 = vpop.xlane.xlu0 %2976
    %v2978 = vld [vmem:[#allocation2] sm:$0x1]
    %v2980 = vlaneseq
    %v2981 = vshrl.u32 %v2980, 7
    %v2982 = vsub.s32 0, %v2981
    %v2983 = vrot.slane %v2978, %v2982
    %v2985 = vadd.f32 %v2977, %v2983
    %v2986 = vxor.u32 %v2985, 2147483648
    %v2987 = vmul.f32 %v2986, 1.442695
    %v2988 = vpow.pop %v2987
    %v2989 = vadd.f32 %v2988, 1.0
    %v2990 = vrcp.pop %v2989
    %v2991 = vmul.f32 1.0, %v2990
    %vm2992 = vcmask 7168
    %2993 = vst.msk [vmem:[%s7] sm:$0xff] %vm2992, %v2991
    // Predicated region
    $region46: #{tpu_custom_call.1} parent=1 // pred_check
      _
    $region47: #{tpu_custom_call.1} parent=1 // pred_check_branch
      %2995 = sbr.rel (0) target = $region49
    $region48: #{tpu_custom_call.1} parent=1 // pred_region
      _
    $region49: #{tpu_custom_call.1} parent=1 // pred_fallthru
      _
    // Predicated region
    $region50: #{tpu_custom_call.1} parent=1 // pred_check
      _
    $region51: #{tpu_custom_call.1} parent=1 // pred_check_branch
      %2997 = sbr.rel (0) target = $region53
    $region52: #{tpu_custom_call.1} parent=1 // pred_region
      _
    $region53: #{tpu_custom_call.1} parent=1 // pred_fallthru
      _
    %2998 = vsyncpa [#allocation4], 1
    %2999 = vsyncpa [#allocation6], 1
    %3000 = vsyncpa [#allocation9], 1

</llo_original>
